<compile_context>
chip_gen: v5e
topology: v5e:2x2
jax: 0.10.0
libtpu: 0.0.40
codegen_flags: <defaults>
</compile_context>

<pallas_src>
import math
import functools

import jax
import jax.numpy as jnp
from jax.experimental import pallas as pl
from jax.experimental.pallas import tpu as pltpu


# --------------------------------------------------------------------------
# Kernel
# --------------------------------------------------------------------------
def _fte_kernel(x_ref, vec_ref, wv_ref, w1_ref, b1_ref, w2_ref, b2_ref,
                dx_ref, dvec_ref, *, hidden_channels):
    H = hidden_channels
    inv_sqrt_2 = 1.0 / math.sqrt(2.0)
    inv_sqrt_h = 1.0 / math.sqrt(H)

    x = x_ref[...]                                    # (tn, H)
    vec = vec_ref[...]                                # (tn, 3H) = [vx | vy | vz]
    wv = wv_ref[...]                                  # (H, 2H)  = [Wv1 | Wv2]

    # vec_proj for each spatial component (fp32 MXU accumulation).
    r0 = jnp.dot(vec[:, :H],       wv, preferred_element_type=jnp.float32)
    r1 = jnp.dot(vec[:, H:2 * H],  wv, preferred_element_type=jnp.float32)
    r2 = jnp.dot(vec[:, 2 * H:],   wv, preferred_element_type=jnp.float32)
    vec1 = (r0[:, :H], r1[:, :H], r2[:, :H])          # lane-aligned when H%128==0
    vec2 = (r0[:, H:], r1[:, H:], r2[:, H:])

    # L1 norm / dot product over the 3 components: pure VPU adds.
    scalar = jnp.abs(vec1[0]) + jnp.abs(vec1[1]) + jnp.abs(vec1[2])
    vec_dot = (vec1[0] * vec2[0] + vec1[1] * vec2[1]
               + vec1[2] * vec2[2]) * inv_sqrt_h

    # xvec_proj: Linear(2H -> H) + SiLU + Linear(H -> 3H); single K=2H
    # contraction for the first layer (lane concat is ~free at H%128==0).
    xin = jnp.concatenate([x, scalar.astype(x.dtype)], axis=-1)     # (tn, 2H)
    h1 = jnp.dot(xin, w1_ref[...], preferred_element_type=jnp.float32)
    h1 = h1 + b1_ref[...]
    h1 = h1 * jax.nn.sigmoid(h1)                                    # SiLU, fp32

    h2 = jnp.dot(h1.astype(x.dtype), w2_ref[...],
                 preferred_element_type=jnp.float32) + b2_ref[...]  # (tn, 3H)
    xvec1 = h2[:, :H]
    xvec2 = h2[:, H:2 * H]
    xvec3 = h2[:, 2 * H:]

    dx_ref[...] = ((xvec1 + xvec2 + vec_dot) * inv_sqrt_2).astype(dx_ref.dtype)

    od = dvec_ref.dtype                               # dvec = xvec3 (broadcast) * vec2
    dvec_ref[:, :H]      = (xvec3 * vec2[0]).astype(od)
    dvec_ref[:, H:2 * H] = (xvec3 * vec2[1]).astype(od)
    dvec_ref[:, 2 * H:]  = (xvec3 * vec2[2]).astype(od)


# --------------------------------------------------------------------------
# Wrapper
# --------------------------------------------------------------------------
def _auto_tile_n(n_nodes, hidden, in_bytes, out_bytes, *,
                 want=1024, vmem_budget=34 * 1024 * 1024):
    """Largest node tile keeping double-buffered I/O blocks + fp32 temps +
    resident weights under `vmem_budget` (sized for v7x's 64 MiB VMEM)."""
    h = hidden
    weights = 2 * (7 * h * h + 6 * h) * 4             # double-buffered, fp32 worst case
    per_row = 8 * h * (in_bytes + out_bytes) + 72 * h  # 2x (x,vec,dx,dvec) + fp32 temps
    avail = max(vmem_budget - weights, 1 << 20)
    tn = min(want, max(32, avail // per_row))
    # v7x has 2 TensorCores: prefer >= 2 grid steps so both get work.
    if n_nodes <= tn:
        tn = max(32, ((n_nodes + 1) // 2 + 31) // 32 * 32)
    return int(tn // 32 * 32)


def fte_forward(x, vec, params, *, tile_n=None,
                vmem_limit_bytes=48 * 1024 * 1024):
    """x: (N, H), vec: (N, 3, H).  Returns (dx (N, H), dvec (N, 3, H))."""
    N, H = x.shape
    assert vec.shape == (N, 3, H), vec.shape
    wv, w1, b1, w2, b2 = params
    assert wv.shape == (H, 2 * H) and w1.shape == (2 * H, H)
    assert w2.shape == (H, 3 * H)
    assert b1.shape == (1, H) and b2.shape == (1, 3 * H)

    # Free row-major view: pack the 3 spatial components onto the lane axis.
    # (No transpose, no pad -> no extra HBM passes.)
    vec2d = vec.reshape(N, 3 * H)

    if tile_n is None:
        tn = _auto_tile_n(N, H, x.dtype.itemsize, x.dtype.itemsize)
    else:
        tn = max(32, (int(tile_n) // 32) * 32)

    grid = (pl.cdiv(N, tn),)   # ragged last block: reads are garbage rows
                               # (row-independent math), OOB writes dropped.

    node_x = pl.BlockSpec((tn, H), lambda i: (i, 0))
    node_v = pl.BlockSpec((tn, 3 * H), lambda i: (i, 0))
    # Resident weights / biases: constant index_map -> DMA'd only once.
    # TODO(synk): single-buffer these (pipeline_mode=pl.Buffered(1)) to halve
    # resident-weight VMEM at large H once that option is safe to rely on.
    w_wv = pl.BlockSpec((H, 2 * H), lambda i: (0, 0))
    w_w1 = pl.BlockSpec((2 * H, H), lambda i: (0, 0))
    w_b1 = pl.BlockSpec((1, H), lambda i: (0, 0))
    w_w2 = pl.BlockSpec((H, 3 * H), lambda i: (0, 0))
    w_b2 = pl.BlockSpec((1, 3 * H), lambda i: (0, 0))

    kernel = functools.partial(_fte_kernel, hidden_channels=H)
    dx, dvec2d = pl.pallas_call(
        kernel,
        out_shape=[jax.ShapeDtypeStruct((N, H), x.dtype),
                   jax.ShapeDtypeStruct((N, 3 * H), vec.dtype)],
        grid_spec=pltpu.PrefetchScalarGridSpec(
            num_scalar_prefetch=0,
            grid=grid,
            in_specs=[node_x, node_v, w_wv, w_w1, w_b1, w_w2, w_b2],
            out_specs=[node_x, node_v],
        ),
        compiler_params=pltpu.CompilerParams(
            dimension_semantics=("parallel",),
            vmem_limit_bytes=int(vmem_limit_bytes)),
    )(x, vec2d, wv, w1, b1, w2, b2)

    return dx, dvec2d.reshape(N, 3, H)


# --------------------------------------------------------------------------
# Params + pure-JAX reference (mirrors the PyTorch forward)
# --------------------------------------------------------------------------
def _xavier_uniform(key, fan_out, fan_in):
    bound = math.sqrt(6.0 / (fan_in + fan_out))
    return jax.random.uniform(key, (fan_out, fan_in), jnp.float32, -bound, bound)


def init_fte_params(key, hidden_channels, bias_scale=0.1):
    """Pre-transposed / fused parameter pack: wv (H,2H), w1 (2H,H), b1 (1,H),
    w2 (H,3H), b2 (1,3H).  PyTorch zero-inits the biases; small random biases
    are used here so the bias-add path is exercised (same forward math)."""
    H = hidden_channels
    k1, k2, k3, k4, k5 = jax.random.split(key, 5)
    wv = _xavier_uniform(k1, 2 * H, H)       # vec_proj.weight     (2H, H)
    w1 = _xavier_uniform(k2, H, 2 * H)       # xvec_proj[0].weight (H, 2H)
    w2 = _xavier_uniform(k3, 3 * H, H)       # xvec_proj[2].weight (3H, H)
    b1 = bias_scale * jax.random.normal(k4, (H,), jnp.float32)
    b2 = bias_scale * jax.random.normal(k5, (3 * H,), jnp.float32)
    return (wv.T, w1.T, b1.reshape(1, H), w2.T, b2.reshape(1, 3 * H))


def fte_reference(x, vec, params):
    H = x.shape[-1]
    wv, w1, b1, w2, b2 = params
    vp = jnp.einsum("nch,hm->ncm", vec, wv)
    vec1, vec2 = vp[..., :H], vp[..., H:]
    scalar = jnp.sum(jnp.abs(vec1), axis=-2)              # L1 over the 3-axis
    vec_dot = jnp.sum(vec1 * vec2, axis=1) / math.sqrt(H)
    xi = jnp.concatenate([x, scalar], axis=-1)
    h1 = xi @ w1 + b1
    h1 = h1 * jax.nn.sigmoid(h1)
    h2 = h1 @ w2 + b2
    xvec1, xvec2, xvec3 = h2[:, :H], h2[:, H:2 * H], h2[:, 2 * H:]
    dx = (xvec1 + xvec2 + vec_dot) / math.sqrt(2.0)
    dvec = xvec3[:, None, :] * vec2
    return dx, dvec


# --------------------------------------------------------------------------
if __name__ == "__main__":
    H = 128                       # lane-dense hidden size (multiple of 128)
    key = jax.random.PRNGKey(0)
    kp, kx, kv, kx2, kv2 = jax.random.split(key, 5)
    params = init_fte_params(kp, H)

    # Tolerances: TPU f32 matmuls at default precision may run as bf16 passes
    # on the MXU, so kernel-vs-XLA-reference differences of O(1e-2) can occur;
    # real bugs (wrong slice / missing scale) show up as O(1) errors.
    TOL_F32 = dict(atol=5e-2, rtol=2e-2)

    # Case 1: multi-tile ragged grid (N % tile_n != 0, no padding pass).
    N = 300
    x = jax.random.normal(kx, (N, H), jnp.float32)
    vec = jax.random.normal(kv, (N, 3, H), jnp.float32)
    dx, dvec = fte_forward(x, vec, params, tile_n=128)
    jax.block_until_ready((dx, dvec))
    dx_r, dvec_r = fte_reference(x, vec, params)
    assert dx.shape == (N, H) and dvec.shape == (N, 3, H)
    assert jnp.allclose(dx, dx_r, **TOL_F32)
    assert jnp.allclose(dvec, dvec_r, **TOL_F32)

    # Case 2: automatic tile selection (>= 2 grid steps for v7x megacore).
    N2 = 64
    x2 = jax.random.normal(kx2, (N2, H), jnp.float32)
    vec2 = jax.random.normal(kv2, (N2, 3, H), jnp.float32)
    dx2, dvec2 = fte_forward(x2, vec2, params)
    jax.block_until_ready((dx2, dvec2))
    dx2_r, dvec2_r = fte_reference(x2, vec2, params)
    assert dx2.shape == (N2, H) and dvec2.shape == (N2, 3, H)
    assert jnp.allclose(dx2, dx2_r, **TOL_F32)
    assert jnp.allclose(dvec2, dvec2_r, **TOL_F32)

    # Case 3: bf16 I/O (halves HBM traffic on v5e/v6e/v7x; kernel keeps fp32
    # accumulation + fp32 epilogue).  Loose tolerances for bf16 rounding.
    params_bf = tuple(p.astype(jnp.bfloat16) for p in params)
    dxb, dvecb = fte_forward(x.astype(jnp.bfloat16),
                             vec.astype(jnp.bfloat16), params_bf)
    jax.block_until_ready((dxb, dvecb))
    assert dxb.dtype == jnp.bfloat16 and dvecb.dtype == jnp.bfloat16
    assert jnp.allclose(dxb.astype(jnp.float32), dx_r, atol=0.5, rtol=0.1)
    assert jnp.allclose(dvecb.astype(jnp.float32), dvec_r, atol=0.5, rtol=0.1)

    print("KERNEL_OK")
</pallas_src>

<mosaic_0001>
module attributes {stable_mosaic.version = 11 : i64} {
  func.func @_fte_kernel(%arg0: i32, %arg1: memref<128x128xf32, #tpu.memory_space<vmem>>, %arg2: memref<128x384xf32, #tpu.memory_space<vmem>>, %arg3: memref<128x256xf32, #tpu.memory_space<vmem>>, %arg4: memref<256x128xf32, #tpu.memory_space<vmem>>, %arg5: memref<1x128xf32, #tpu.memory_space<vmem>>, %arg6: memref<128x384xf32, #tpu.memory_space<vmem>>, %arg7: memref<1x384xf32, #tpu.memory_space<vmem>>, %arg8: memref<128x128xf32, #tpu.memory_space<vmem>>, %arg9: memref<128x384xf32, #tpu.memory_space<vmem>>) attributes {dimension_semantics = [#tpu.dimension_semantics<parallel>], iteration_bounds = array<i64: 3>, scalar_prefetch = 0 : i64, scratch_operands = 0 : i64, tpu.core_type = #tpu.core_type<tc>, window_params = [{transform_indices = @transform_0, window_bounds = array<i64: 128, 128>}, {transform_indices = @transform_1, window_bounds = array<i64: 128, 384>}, {pipeline_mode = #tpu.pipeline_mode<synchronous>, transform_indices = @transform_2, window_bounds = array<i64: 128, 256>}, {pipeline_mode = #tpu.pipeline_mode<synchronous>, transform_indices = @transform_3, window_bounds = array<i64: 256, 128>}, {pipeline_mode = #tpu.pipeline_mode<synchronous>, transform_indices = @transform_4, window_bounds = array<i64: 1, 128>}, {pipeline_mode = #tpu.pipeline_mode<synchronous>, transform_indices = @transform_5, window_bounds = array<i64: 128, 384>}, {pipeline_mode = #tpu.pipeline_mode<synchronous>, transform_indices = @transform_6, window_bounds = array<i64: 1, 384>}, {transform_indices = @transform_7, window_bounds = array<i64: 128, 128>}, {transform_indices = @transform_8, window_bounds = array<i64: 128, 384>}]} {
    %c0 = arith.constant 0 : index
    %c0_0 = arith.constant 0 : index
    %0 = vector.load %arg1[%c0, %c0_0] : memref<128x128xf32, #tpu.memory_space<vmem>>, vector<128x128xf32>
    %c0_1 = arith.constant 0 : index
    %c0_2 = arith.constant 0 : index
    %1 = vector.load %arg2[%c0_1, %c0_2] : memref<128x384xf32, #tpu.memory_space<vmem>>, vector<128x384xf32>
    %c0_3 = arith.constant 0 : index
    %c0_4 = arith.constant 0 : index
    %2 = vector.load %arg3[%c0_3, %c0_4] : memref<128x256xf32, #tpu.memory_space<vmem>>, vector<128x256xf32>
    %3 = vector.extract_strided_slice %1 {offsets = [0, 0], sizes = [128, 128], strides = [1, 1]} : vector<128x384xf32> to vector<128x128xf32>
    %cst = arith.constant dense<0.000000e+00> : vector<128x256xf32>
    %4 = tpu.matmul %3, %2, %cst {dimension_numbers = #tpu.dot_dimension_numbers<[1], [0], [0], [1], [0, 0, 1, 1], [], []>} : vector<128x128xf32>, vector<128x256xf32>, vector<128x256xf32> -> vector<128x256xf32>
    %5 = vector.extract_strided_slice %1 {offsets = [0, 128], sizes = [128, 128], strides = [1, 1]} : vector<128x384xf32> to vector<128x128xf32>
    %cst_5 = arith.constant dense<0.000000e+00> : vector<128x256xf32>
    %6 = tpu.matmul %5, %2, %cst_5 {dimension_numbers = #tpu.dot_dimension_numbers<[1], [0], [0], [1], [0, 0, 1, 1], [], []>} : vector<128x128xf32>, vector<128x256xf32>, vector<128x256xf32> -> vector<128x256xf32>
    %7 = vector.extract_strided_slice %1 {offsets = [0, 256], sizes = [128, 128], strides = [1, 1]} : vector<128x384xf32> to vector<128x128xf32>
    %cst_6 = arith.constant dense<0.000000e+00> : vector<128x256xf32>
    %8 = tpu.matmul %7, %2, %cst_6 {dimension_numbers = #tpu.dot_dimension_numbers<[1], [0], [0], [1], [0, 0, 1, 1], [], []>} : vector<128x128xf32>, vector<128x256xf32>, vector<128x256xf32> -> vector<128x256xf32>
    %9 = vector.extract_strided_slice %4 {offsets = [0, 0], sizes = [128, 128], strides = [1, 1]} : vector<128x256xf32> to vector<128x128xf32>
    %10 = vector.extract_strided_slice %6 {offsets = [0, 0], sizes = [128, 128], strides = [1, 1]} : vector<128x256xf32> to vector<128x128xf32>
    %11 = vector.extract_strided_slice %8 {offsets = [0, 0], sizes = [128, 128], strides = [1, 1]} : vector<128x256xf32> to vector<128x128xf32>
    %12 = vector.extract_strided_slice %4 {offsets = [0, 128], sizes = [128, 128], strides = [1, 1]} : vector<128x256xf32> to vector<128x128xf32>
    %13 = vector.extract_strided_slice %6 {offsets = [0, 128], sizes = [128, 128], strides = [1, 1]} : vector<128x256xf32> to vector<128x128xf32>
    %14 = vector.extract_strided_slice %8 {offsets = [0, 128], sizes = [128, 128], strides = [1, 1]} : vector<128x256xf32> to vector<128x128xf32>
    %15 = math.absf %9 : vector<128x128xf32>
    %16 = math.absf %10 : vector<128x128xf32>
    %17 = arith.addf %15, %16 : vector<128x128xf32>
    %18 = math.absf %11 : vector<128x128xf32>
    %19 = arith.addf %17, %18 : vector<128x128xf32>
    %20 = arith.mulf %9, %12 : vector<128x128xf32>
    %21 = arith.mulf %10, %13 : vector<128x128xf32>
    %22 = arith.addf %20, %21 : vector<128x128xf32>
    %23 = arith.mulf %11, %14 : vector<128x128xf32>
    %24 = arith.addf %22, %23 : vector<128x128xf32>
    %cst_7 = arith.constant 0.0883883461 : f32
    %25 = vector.broadcast %cst_7 : f32 to vector<128x128xf32>
    %26 = arith.mulf %24, %25 : vector<128x128xf32>
    %27 = tpu.concatenate %0, %19 in 1 : vector<128x128xf32>, vector<128x128xf32> -> vector<128x256xf32>
    %c0_8 = arith.constant 0 : index
    %c0_9 = arith.constant 0 : index
    %28 = vector.load %arg4[%c0_8, %c0_9] : memref<256x128xf32, #tpu.memory_space<vmem>>, vector<256x128xf32>
    %cst_10 = arith.constant dense<0.000000e+00> : vector<128x128xf32>
    %29 = tpu.matmul %27, %28, %cst_10 {dimension_numbers = #tpu.dot_dimension_numbers<[1], [0], [0], [1], [0, 0, 1, 1], [], []>} : vector<128x256xf32>, vector<256x128xf32>, vector<128x128xf32> -> vector<128x128xf32>
    %c0_11 = arith.constant 0 : index
    %c0_12 = arith.constant 0 : index
    %30 = vector.load %arg5[%c0_11, %c0_12] : memref<1x128xf32, #tpu.memory_space<vmem>>, vector<1x128xf32>
    %31 = vector.broadcast %30 : vector<1x128xf32> to vector<128x128xf32>
    %32 = arith.addf %29, %31 : vector<128x128xf32>
    %33 = arith.negf %32 : vector<128x128xf32>
    %34 = math.exp %33 : vector<128x128xf32>
    %cst_13 = arith.constant 1.000000e+00 : f32
    %35 = vector.broadcast %cst_13 : f32 to vector<128x128xf32>
    %36 = arith.addf %35, %34 : vector<128x128xf32>
    %37 = arith.divf %35, %36 : vector<128x128xf32>
    %38 = arith.mulf %32, %37 : vector<128x128xf32>
    %c0_14 = arith.constant 0 : index
    %c0_15 = arith.constant 0 : index
    %39 = vector.load %arg6[%c0_14, %c0_15] : memref<128x384xf32, #tpu.memory_space<vmem>>, vector<128x384xf32>
    %cst_16 = arith.constant dense<0.000000e+00> : vector<128x384xf32>
    %40 = tpu.matmul %38, %39, %cst_16 {dimension_numbers = #tpu.dot_dimension_numbers<[1], [0], [0], [1], [0, 0, 1, 1], [], []>} : vector<128x128xf32>, vector<128x384xf32>, vector<128x384xf32> -> vector<128x384xf32>
    %c0_17 = arith.constant 0 : index
    %c0_18 = arith.constant 0 : index
    %41 = vector.load %arg7[%c0_17, %c0_18] : memref<1x384xf32, #tpu.memory_space<vmem>>, vector<1x384xf32>
    %42 = vector.broadcast %41 : vector<1x384xf32> to vector<128x384xf32>
    %43 = arith.addf %40, %42 : vector<128x384xf32>
    %44 = vector.extract_strided_slice %43 {offsets = [0, 0], sizes = [128, 128], strides = [1, 1]} : vector<128x384xf32> to vector<128x128xf32>
    %45 = vector.extract_strided_slice %43 {offsets = [0, 128], sizes = [128, 128], strides = [1, 1]} : vector<128x384xf32> to vector<128x128xf32>
    %46 = vector.extract_strided_slice %43 {offsets = [0, 256], sizes = [128, 128], strides = [1, 1]} : vector<128x384xf32> to vector<128x128xf32>
    %47 = arith.addf %44, %45 : vector<128x128xf32>
    %48 = arith.addf %47, %26 : vector<128x128xf32>
    %cst_19 = arith.constant 0.707106769 : f32
    %49 = vector.broadcast %cst_19 : f32 to vector<128x128xf32>
    %50 = arith.mulf %48, %49 : vector<128x128xf32>
    %c0_20 = arith.constant 0 : index
    %c0_21 = arith.constant 0 : index
    %51 = vector.load %arg8[%c0_20, %c0_21] : memref<128x128xf32, #tpu.memory_space<vmem>>, vector<128x128xf32>
    tpu.vector_store %arg8[%c0_20, %c0_21], %50 {strides = array<i32>} : memref<128x128xf32, #tpu.memory_space<vmem>>, vector<128x128xf32>,
    %52 = arith.mulf %46, %12 : vector<128x128xf32>
    %c0_22 = arith.constant 0 : index
    %c0_23 = arith.constant 0 : index
    %53 = vector.load %arg9[%c0_22, %c0_23] : memref<128x384xf32, #tpu.memory_space<vmem>>, vector<128x128xf32>
    tpu.vector_store %arg9[%c0_22, %c0_23], %52 {strides = array<i32>} : memref<128x384xf32, #tpu.memory_space<vmem>>, vector<128x128xf32>,
    %54 = arith.mulf %46, %13 : vector<128x128xf32>
    %c0_24 = arith.constant 0 : index
    %c128 = arith.constant 128 : index
    %55 = vector.load %arg9[%c0_24, %c128] : memref<128x384xf32, #tpu.memory_space<vmem>>, vector<128x128xf32>
    tpu.vector_store %arg9[%c0_24, %c128], %54 {strides = array<i32>} : memref<128x384xf32, #tpu.memory_space<vmem>>, vector<128x128xf32>,
    %56 = arith.mulf %46, %14 : vector<128x128xf32>
    %c0_25 = arith.constant 0 : index
    %c256 = arith.constant 256 : index
    %57 = vector.load %arg9[%c0_25, %c256] : memref<128x384xf32, #tpu.memory_space<vmem>>, vector<128x128xf32>
    tpu.vector_store %arg9[%c0_25, %c256], %56 {strides = array<i32>} : memref<128x384xf32, #tpu.memory_space<vmem>>, vector<128x128xf32>,
    return
  }
  func.func @transform_0(%arg0: i32) -> (i32, i32) {
    %c0_i32 = arith.constant 0 : i32
    %c0_i32_0 = arith.constant 0 : i32
    return %arg0, %c0_i32 : i32, i32
  }
  func.func @transform_1(%arg0: i32) -> (i32, i32) {
    %c0_i32 = arith.constant 0 : i32
    %c0_i32_0 = arith.constant 0 : i32
    return %arg0, %c0_i32 : i32, i32
  }
  func.func @transform_2(%arg0: i32) -> (i32, i32) {
    %c0_i32 = arith.constant 0 : i32
    %c0_i32_0 = arith.constant 0 : i32
    %c0_i32_1 = arith.constant 0 : i32
    return %c0_i32, %c0_i32_0 : i32, i32
  }
  func.func @transform_3(%arg0: i32) -> (i32, i32) {
    %c0_i32 = arith.constant 0 : i32
    %c0_i32_0 = arith.constant 0 : i32
    %c0_i32_1 = arith.constant 0 : i32
    return %c0_i32, %c0_i32_0 : i32, i32
  }
  func.func @transform_4(%arg0: i32) -> (i32, i32) {
    %c0_i32 = arith.constant 0 : i32
    %c0_i32_0 = arith.constant 0 : i32
    %c0_i32_1 = arith.constant 0 : i32
    return %c0_i32, %c0_i32_0 : i32, i32
  }
  func.func @transform_5(%arg0: i32) -> (i32, i32) {
    %c0_i32 = arith.constant 0 : i32
    %c0_i32_0 = arith.constant 0 : i32
    %c0_i32_1 = arith.constant 0 : i32
    return %c0_i32, %c0_i32_0 : i32, i32
  }
  func.func @transform_6(%arg0: i32) -> (i32, i32) {
    %c0_i32 = arith.constant 0 : i32
    %c0_i32_0 = arith.constant 0 : i32
    %c0_i32_1 = arith.constant 0 : i32
    return %c0_i32, %c0_i32_0 : i32, i32
  }
  func.func @transform_7(%arg0: i32) -> (i32, i32) {
    %c0_i32 = arith.constant 0 : i32
    %c0_i32_0 = arith.constant 0 : i32
    return %arg0, %c0_i32 : i32, i32
  }
  func.func @transform_8(%arg0: i32) -> (i32, i32) {
    %c0_i32 = arith.constant 0 : i32
    %c0_i32_0 = arith.constant 0 : i32
    return %arg0, %c0_i32 : i32, i32
  }
}

</mosaic_0001>

<llo_original>
// kernel: tpu_custom_call.1
$region0: #{tpu_custom_call.1}
  #allocation0 [shape = 'u32[]', space=smem, size = 0x4, offset = 0x4, fixed_abs, tag = 'smem constant byte address 0x4 - core index']
  #allocation1 [shape = 'u32[72,128]{1,0:T(1,128)}', space=vmem, size = 0x9000, scoped, tag = 'internal scratch']
  %s0 = inlined_call_operand.hbm [shape: f32[300,128], index: 0, kind: input, shape index: {}]
  %s1 = inlined_call_operand.hbm [shape: f32[300,384], index: 1, kind: input, shape index: {}]
  %s2 = inlined_call_operand.hbm [shape: f32[128,256], index: 2, kind: input, shape index: {}]
  %s3 = inlined_call_operand.hbm [shape: f32[256,128], index: 3, kind: input, shape index: {}]
  %s4 = inlined_call_operand.vmem [shape: f32[1,128], index: 4, kind: input, shape index: {}]
  %s5 = inlined_call_operand.hbm [shape: f32[128,384], index: 5, kind: input, shape index: {}]
  %s6 = inlined_call_operand.vmem [shape: f32[1,384], index: 6, kind: input, shape index: {}]
  %s7 = inlined_call_operand.hbm [shape: f32[300,128], index: 7, kind: output, shape index: {0}]
  %s8 = inlined_call_operand.hbm [shape: f32[300,384], index: 8, kind: output, shape index: {1}]
  %9 = xla_tuple %s7, %s8
  %s10 = sld [smem:[#allocation0]]
  $region89: #{tpu_custom_call.1} parent=0
    _
  %s12 = ssub.s32 1, %s10
  %s13 = scalar_select 0, %s12, %s10
  $region1: #{tpu_custom_call.1} parent=0
    #allocation2 [shape = 'u8[131072]{0}', space=vmem, size = 0x20000, scoped, tag = 'input window, operand 0']
    #allocation3 [shape = 's32[2]{0}', space=sflag, size = 0x8, scoped, tag = 'scoped memory for tpu_custom_call.1']
    #allocation4 [shape = 's32[2]{0}', space=sflag, size = 0x8, scoped, tag = 'scoped memory for tpu_custom_call.1']
    #allocation5 [shape = 'u8[393216]{0}', space=vmem, size = 0x60000, scoped, tag = 'input window, operand 1']
    #allocation6 [shape = 's32[2]{0}', space=sflag, size = 0x8, scoped, tag = 'scoped memory for tpu_custom_call.1']
    #allocation7 [shape = 'u8[131072]{0}', space=vmem, size = 0x20000, scoped, tag = 'input window, operand 2, single buffered']
    #allocation8 [shape = 'u8[131072]{0}', space=vmem, size = 0x20000, scoped, tag = 'input window, operand 3, single buffered']
    #allocation9 [shape = 's32[1]{0}', space=sflag, size = 0x4, scoped, tag = 'scoped memory for tpu_custom_call.1']
    #allocation10 [shape = 'u8[196608]{0}', space=vmem, size = 0x30000, scoped, tag = 'input window, operand 5, single buffered']
    #allocation11 [shape = 'u8[131072]{0}', space=vmem, size = 0x20000, scoped, tag = 'output window, operand 0']
    #allocation12 [shape = 'u8[393216]{0}', space=vmem, size = 0x60000, scoped, tag = 'output window, operand 1']
    #allocation13 [shape = 's32[2]{0}', space=sflag, size = 0x8, scoped, tag = 'scoped memory for tpu_custom_call.1']
    %14 = vsyncpa [#allocation3], 0
    %s15 = scalar_lea.sflag [#allocation3], 1
    %16 = vsyncpa %s15, 0
    %17 = vsyncpa [#allocation6], 0
    %s18 = scalar_lea.sflag [#allocation6], 1
    %19 = vsyncpa %s18, 0
    %20 = vsyncpa [#allocation9], 0
    %21 = vsyncpa [#allocation4], 0
    %s22 = scalar_lea.sflag [#allocation4], 1
    %23 = vsyncpa %s22, 0
    %24 = vsyncpa [#allocation13], 0
    %s25 = scalar_lea.sflag [#allocation13], 1
    %26 = vsyncpa %s25, 0
    loop: start=0, step=1, limit=5
    $region2: #{tpu_custom_call.1} parent=1 // loop_pre_header
      _
    $region3: #{tpu_custom_call.1} parent=1 // loop_header
      %s28 = sphi 0, %s32
      %p29 = scmp.ge.s32.totalorder %s28, 5
      %s38 = sphi 0, %s40
      %s41 = sphi 0, %s38
      %s42 = sphi 0, %s41
      %s58 = sphi 0, %s42
      %s64 = sphi 0, %s66
      %s67 = sphi 0, %s64
      %s68 = sphi 0, %s67
      %s84 = sphi 0, %s68
      %s88 = sphi 0, %s88
      %s90 = sphi 0, %s88
      %s91 = sphi 0, %s90
      %s105 = sphi 0, %s91
      %s109 = sphi 0, %s109
      %s111 = sphi 0, %s109
      %s112 = sphi 0, %s111
      %s126 = sphi 0, %s112
      %s130 = sphi 0, %s130
      %s132 = sphi 0, %s130
      %s133 = sphi 0, %s132
      %s147 = sphi 0, %s133
      %s151 = sphi 0, %s151
      %s153 = sphi 0, %s151
      %s154 = sphi 0, %s153
      %s168 = sphi 0, %s154
      %s172 = sphi 0, %s172
      %s174 = sphi 0, %s172
      %s175 = sphi 0, %s174
      %s189 = sphi 0, %s175
      %s195 = sphi 0, %s197
      %s198 = sphi 0, %s195
      %s199 = sphi 0, %s198
      %s215 = sphi 0, %s199
      %s221 = sphi 0, %s223
      %s224 = sphi 0, %s221
      %s225 = sphi 0, %s224
      %s241 = sphi 0, %s225
    $region4: #{tpu_custom_call.1} parent=1 // loop_header_branch
      %31 = sbr.rel (%p29) target = $region8
    $region5: #{tpu_custom_call.1} parent=1 // loop_body
      %s33 = ssub.s32 %s28, 1
      %s34 = ssub.s32 %s28, 2
      %s35 = sadd.s32 %s28, 1
      %s36 = ssub.s32 %s28, %s35
      %p37 = scmp.eq.s32.totalorder %s36, 0
      %s39 = sadd.s32 %s38, 1
      %s40 = scalar_select %p37, %s38, %s39
      %p43 = pneg %p37
      %p44 = scmp.eq.s32.totalorder %s28, 2
      %p45 = por %p43, %p44
      %p46 = scmp.ne.s32.totalorder %s38, %s41
      %p47 = scmp.eq.s32.totalorder %s28, 0
      %p48 = por %p46, %p47
      %p49 = scmp.ne.s32.totalorder %s38, %s41
      %p50 = scmp.eq.s32.totalorder %s33, 2
      %p51 = por %p49, %p50
      %p52 = scmp.ne.s32.totalorder %s41, %s42
      %p53 = scmp.eq.s32.totalorder %s33, 0
      %p54 = por %p52, %p53
      %p55 = scmp.ne.s32.totalorder %s41, %s42
      %p56 = scmp.eq.s32.totalorder %s34, 2
      %p57 = por %p55, %p56
      %p59 = scmp.ne.s32.totalorder %s42, %s58
      %p60 = scmp.eq.s32.totalorder %s34, 0
      %p61 = por %p59, %p60
      %s62 = ssub.s32 %s28, %s35
      %p63 = scmp.eq.s32.totalorder %s62, 0
      %s65 = sadd.s32 %s64, 1
      %s66 = scalar_select %p63, %s64, %s65
      %p69 = pneg %p63
      %p70 = scmp.eq.s32.totalorder %s28, 2
      %p71 = por %p69, %p70
      %p72 = scmp.ne.s32.totalorder %s64, %s67
      %p73 = scmp.eq.s32.totalorder %s28, 0
      %p74 = por %p72, %p73
      %p75 = scmp.ne.s32.totalorder %s64, %s67
      %p76 = scmp.eq.s32.totalorder %s33, 2
      %p77 = por %p75, %p76
      %p78 = scmp.ne.s32.totalorder %s67, %s68
      %p79 = scmp.eq.s32.totalorder %s33, 0
      %p80 = por %p78, %p79
      %p81 = scmp.ne.s32.totalorder %s67, %s68
      %p82 = scmp.eq.s32.totalorder %s34, 2
      %p83 = por %p81, %p82
      %p85 = scmp.ne.s32.totalorder %s68, %s84
      %p86 = scmp.eq.s32.totalorder %s34, 0
      %p87 = por %p85, %p86
      %s89 = sadd.s32 %s88, 1
      %p92 = scmp.eq.s32.totalorder %s28, 2
      %p93 = scmp.ne.s32.totalorder %s88, %s90
      %p94 = scmp.eq.s32.totalorder %s28, 0
      %p95 = por %p93, %p94
      %p96 = scmp.ne.s32.totalorder %s88, %s90
      %p97 = scmp.eq.s32.totalorder %s33, 2
      %p98 = por %p96, %p97
      %p99 = scmp.ne.s32.totalorder %s90, %s91
      %p100 = scmp.eq.s32.totalorder %s33, 0
      %p101 = por %p99, %p100
      %p102 = scmp.ne.s32.totalorder %s90, %s91
      %p103 = scmp.eq.s32.totalorder %s34, 2
      %p104 = por %p102, %p103
      %p106 = scmp.ne.s32.totalorder %s91, %s105
      %p107 = scmp.eq.s32.totalorder %s34, 0
      %p108 = por %p106, %p107
      %s110 = sadd.s32 %s109, 1
      %p113 = scmp.eq.s32.totalorder %s28, 2
      %p114 = scmp.ne.s32.totalorder %s109, %s111
      %p115 = scmp.eq.s32.totalorder %s28, 0
      %p116 = por %p114, %p115
      %p117 = scmp.ne.s32.totalorder %s109, %s111
      %p118 = scmp.eq.s32.totalorder %s33, 2
      %p119 = por %p117, %p118
      %p120 = scmp.ne.s32.totalorder %s111, %s112
      %p121 = scmp.eq.s32.totalorder %s33, 0
      %p122 = por %p120, %p121
      %p123 = scmp.ne.s32.totalorder %s111, %s112
      %p124 = scmp.eq.s32.totalorder %s34, 2
      %p125 = por %p123, %p124
      %p127 = scmp.ne.s32.totalorder %s112, %s126
      %p128 = scmp.eq.s32.totalorder %s34, 0
      %p129 = por %p127, %p128
      %s131 = sadd.s32 %s130, 1
      %p134 = scmp.eq.s32.totalorder %s28, 2
      %p135 = scmp.ne.s32.totalorder %s130, %s132
      %p136 = scmp.eq.s32.totalorder %s28, 0
      %p137 = por %p135, %p136
      %p138 = scmp.ne.s32.totalorder %s130, %s132
      %p139 = scmp.eq.s32.totalorder %s33, 2
      %p140 = por %p138, %p139
      %p141 = scmp.ne.s32.totalorder %s132, %s133
      %p142 = scmp.eq.s32.totalorder %s33, 0
      %p143 = por %p141, %p142
      %p144 = scmp.ne.s32.totalorder %s132, %s133
      %p145 = scmp.eq.s32.totalorder %s34, 2
      %p146 = por %p144, %p145
      %p148 = scmp.ne.s32.totalorder %s133, %s147
      %p149 = scmp.eq.s32.totalorder %s34, 0
      %p150 = por %p148, %p149
      %s152 = sadd.s32 %s151, 1
      %p155 = scmp.eq.s32.totalorder %s28, 2
      %p156 = scmp.ne.s32.totalorder %s151, %s153
      %p157 = scmp.eq.s32.totalorder %s28, 0
      %p158 = por %p156, %p157
      %p159 = scmp.ne.s32.totalorder %s151, %s153
      %p160 = scmp.eq.s32.totalorder %s33, 2
      %p161 = por %p159, %p160
      %p162 = scmp.ne.s32.totalorder %s153, %s154
      %p163 = scmp.eq.s32.totalorder %s33, 0
      %p164 = por %p162, %p163
      %p165 = scmp.ne.s32.totalorder %s153, %s154
      %p166 = scmp.eq.s32.totalorder %s34, 2
      %p167 = por %p165, %p166
      %p169 = scmp.ne.s32.totalorder %s154, %s168
      %p170 = scmp.eq.s32.totalorder %s34, 0
      %p171 = por %p169, %p170
      %s173 = sadd.s32 %s172, 1
      %p176 = scmp.eq.s32.totalorder %s28, 2
      %p177 = scmp.ne.s32.totalorder %s172, %s174
      %p178 = scmp.eq.s32.totalorder %s28, 0
      %p179 = por %p177, %p178
      %p180 = scmp.ne.s32.totalorder %s172, %s174
      %p181 = scmp.eq.s32.totalorder %s33, 2
      %p182 = por %p180, %p181
      %p183 = scmp.ne.s32.totalorder %s174, %s175
      %p184 = scmp.eq.s32.totalorder %s33, 0
      %p185 = por %p183, %p184
      %p186 = scmp.ne.s32.totalorder %s174, %s175
      %p187 = scmp.eq.s32.totalorder %s34, 2
      %p188 = por %p186, %p187
      %p190 = scmp.ne.s32.totalorder %s175, %s189
      %p191 = scmp.eq.s32.totalorder %s34, 0
      %p192 = por %p190, %p191
      %s193 = ssub.s32 %s28, %s35
      %p194 = scmp.eq.s32.totalorder %s193, 0
      %s196 = sadd.s32 %s195, 1
      %s197 = scalar_select %p194, %s195, %s196
      %p200 = pneg %p194
      %p201 = scmp.eq.s32.totalorder %s28, 2
      %p202 = por %p200, %p201
      %p203 = scmp.ne.s32.totalorder %s195, %s198
      %p204 = scmp.eq.s32.totalorder %s28, 0
      %p205 = por %p203, %p204
      %p206 = scmp.ne.s32.totalorder %s195, %s198
      %p207 = scmp.eq.s32.totalorder %s33, 2
      %p208 = por %p206, %p207
      %p209 = scmp.ne.s32.totalorder %s198, %s199
      %p210 = scmp.eq.s32.totalorder %s33, 0
      %p211 = por %p209, %p210
      %p212 = scmp.ne.s32.totalorder %s198, %s199
      %p213 = scmp.eq.s32.totalorder %s34, 2
      %p214 = por %p212, %p213
      %p216 = scmp.ne.s32.totalorder %s199, %s215
      %p217 = scmp.eq.s32.totalorder %s34, 0
      %p218 = por %p216, %p217
      %s219 = ssub.s32 %s28, %s35
      %p220 = scmp.eq.s32.totalorder %s219, 0
      %s222 = sadd.s32 %s221, 1
      %s223 = scalar_select %p220, %s221, %s222
      %p226 = pneg %p220
      %p227 = scmp.eq.s32.totalorder %s28, 2
      %p228 = por %p226, %p227
      %p229 = scmp.ne.s32.totalorder %s221, %s224
      %p230 = scmp.eq.s32.totalorder %s28, 0
      %p231 = por %p229, %p230
      %p232 = scmp.ne.s32.totalorder %s221, %s224
      %p233 = scmp.eq.s32.totalorder %s33, 2
      %p234 = por %p232, %p233
      %p235 = scmp.ne.s32.totalorder %s224, %s225
      %p236 = scmp.eq.s32.totalorder %s33, 0
      %p237 = por %p235, %p236
      %p238 = scmp.ne.s32.totalorder %s224, %s225
      %p239 = scmp.eq.s32.totalorder %s34, 2
      %p240 = por %p238, %p239
      %p242 = scmp.ne.s32.totalorder %s225, %s241
      %p243 = scmp.eq.s32.totalorder %s34, 0
      %p244 = por %p242, %p243
      %p245 = scmp.le.s32.totalorder 1, %s28
      %p246 = scmp.lt.s32.totalorder %s28, 4
      %p247 = pnand %p245, %p246
      %p248 = pneg %p247
      // Predicated region
      $region9: #{tpu_custom_call.1} parent=5 // pred_check
        _
      $region10: #{tpu_custom_call.1} parent=5 // pred_check_branch
        %250 = sbr.rel (%p247) target = $region12
      $region11: #{tpu_custom_call.1} parent=5 // pred_region
        %s251 = ssub.s32 %s28, 1
        // Predicated region
        $region13: #{tpu_custom_call.1} parent=11 // pred_check
          %p252 = pneg %p101
        $region14: #{tpu_custom_call.1} parent=11 // pred_check_branch
          %254 = sbr.rel (%p252) target = $region16
        $region15: #{tpu_custom_call.1} parent=11 // pred_region
          %256 = vsyncadd [#allocation6], 0
          %s257 = sshll.u32 %s2, 4
          %s258 = int_to_ptr.hbm [resolvable:$true] %s257
          %s259 = sshll.u32 [#allocation7], 4
          %s260 = int_to_ptr.vmem [resolvable:$true] %s259
          %265 = dma.hbm_to_vmem [thread:$0]  %s258, 4096, %s260, [#allocation6], 256, 256, 16
        $region16: #{tpu_custom_call.1} parent=11 // pred_fallthru
          _
        // Predicated region
        $region17: #{tpu_custom_call.1} parent=11 // pred_check
          %p266 = pneg %p122
        $region18: #{tpu_custom_call.1} parent=11 // pred_check_branch
          %268 = sbr.rel (%p266) target = $region20
        $region19: #{tpu_custom_call.1} parent=11 // pred_region
          %270 = vsyncadd [#allocation9], 0
          %s271 = sshll.u32 %s3, 4
          %s272 = int_to_ptr.hbm [resolvable:$true] %s271
          %s273 = sshll.u32 [#allocation8], 4
          %s274 = int_to_ptr.vmem [resolvable:$true] %s273
          %279 = dma.hbm_to_vmem [thread:$0]  %s272, 4096, %s274, [#allocation9], 128, 128, 8
        $region20: #{tpu_custom_call.1} parent=11 // pred_fallthru
          _
        // Predicated region
        $region21: #{tpu_custom_call.1} parent=11 // pred_check
          %p280 = pneg %p143
        $region22: #{tpu_custom_call.1} parent=11 // pred_check_branch
          %282 = sbr.rel (%p280) target = $region24
        $region23: #{tpu_custom_call.1} parent=11 // pred_region
          _
        $region24: #{tpu_custom_call.1} parent=11 // pred_fallthru
          _
        // Predicated region
        $region25: #{tpu_custom_call.1} parent=11 // pred_check
          %p283 = pneg %p164
        $region26: #{tpu_custom_call.1} parent=11 // pred_check_branch
          %285 = sbr.rel (%p283) target = $region28
        $region27: #{tpu_custom_call.1} parent=11 // pred_region
          %287 = vsyncadd [#allocation9], 0
          %s288 = sshll.u32 %s5, 4
          %s289 = int_to_ptr.hbm [resolvable:$true] %s288
          %s290 = sshll.u32 [#allocation10], 4
          %s291 = int_to_ptr.vmem [resolvable:$true] %s290
          %296 = dma.hbm_to_vmem [thread:$0]  %s289, 6144, %s291, [#allocation9], 384, 384, 24
        $region28: #{tpu_custom_call.1} parent=11 // pred_fallthru
          _
        // Predicated region
        $region29: #{tpu_custom_call.1} parent=11 // pred_check
          %p297 = pneg %p185
        $region30: #{tpu_custom_call.1} parent=11 // pred_check_branch
          %299 = sbr.rel (%p297) target = $region32
        $region31: #{tpu_custom_call.1} parent=11 // pred_region
          _
        $region32: #{tpu_custom_call.1} parent=11 // pred_fallthru
          _
      $region12: #{tpu_custom_call.1} parent=5 // pred_fallthru
        _
      %p300 = scmp.lt.s32.totalorder %s28, 3
      // Predicated region
      $region33: #{tpu_custom_call.1} parent=5 // pred_check
        %p301 = pneg %p300
      $region34: #{tpu_custom_call.1} parent=5 // pred_check_branch
        %303 = sbr.rel (%p301) target = $region36
      $region35: #{tpu_custom_call.1} parent=5 // pred_region
        // Predicated region
        $region37: #{tpu_custom_call.1} parent=35 // pred_check
          %p304 = pneg %p48
        $region38: #{tpu_custom_call.1} parent=35 // pred_check_branch
          %306 = sbr.rel (%p304) target = $region40
        $region39: #{tpu_custom_call.1} parent=35 // pred_region
          %s307 = sand.u32 %s38, 1
          %s308 = scalar_lea.sflag [#allocation3], %s307
          %s309 = sand.u32 %s38, 1
          %s310 = smul.addr %s309, 128
          %s311 = scalar_lea.vmem [#allocation2], %s310
          %s312 = smul.u32 16, %s28
          %s313 = ssub.s32 38, %s312
          %p314 = scmp.lt.s32.totalorder %s313, 16
          %s315 = scalar_select %p314, %s313, 16
          %s316 = smul.u32 8, %s315
          %s317 = ssub.s32 128, %s316
          %s318 = sshll.u32 %s317, 4
          %319 = vsyncadd %s308, %s318
          %p320 = scmp.ne.s32.totalorder 0, %s316
          %s321 = smul.addr %s312, 8
          %s322 = scalar_lea.hbm %s0, %s321
          %s323 = smul.u32 8, %s315
          %s324 = sshll.u32 %s322, 4
          %s325 = int_to_ptr.hbm [resolvable:$true] %s324
          %s326 = sshll.u32 %s311, 4
          %s327 = int_to_ptr.vmem [resolvable:$true] %s326
          %s328 = sshll.u32 %s323, 4
          %332 = dma.hbm_to_vmem [thread:$0]  (%p320), %s325, %s328, %s327, %s308, 128, 128, 8
        $region40: #{tpu_custom_call.1} parent=35 // pred_fallthru
          _
        // Predicated region
        $region41: #{tpu_custom_call.1} parent=35 // pred_check
          %p333 = pneg %p74
        $region42: #{tpu_custom_call.1} parent=35 // pred_check_branch
          %335 = sbr.rel (%p333) target = $region44
        $region43: #{tpu_custom_call.1} parent=35 // pred_region
          %s336 = sand.u32 %s28, 1
          %s337 = scalar_lea.sflag [#allocation6], %s336
          %s338 = sand.u32 %s64, 1
          %s339 = smul.addr %s338, 384
          %s340 = scalar_lea.vmem [#allocation5], %s339
          %s341 = smul.u32 16, %s28
          %s342 = ssub.s32 38, %s341
          %p343 = scmp.lt.s32.totalorder %s342, 16
          %s344 = scalar_select %p343, %s342, 16
          %s345 = smul.u32 8, %s344
          %s346 = smul.u32 %s345, 3
          %s347 = ssub.s32 384, %s346
          %s348 = sshll.u32 %s347, 4
          %349 = vsyncadd %s337, %s348
          %p350 = scmp.ne.s32.totalorder 0, %s346
          %s351 = smul.addr %s341, 3
          %s352 = smul.addr %s351, 8
          %s353 = scalar_lea.hbm %s1, %s352
          %s354 = smul.u32 24, %s344
          %s355 = sshll.u32 %s353, 4
          %s356 = int_to_ptr.hbm [resolvable:$true] %s355
          %s357 = sshll.u32 %s340, 4
          %s358 = int_to_ptr.vmem [resolvable:$true] %s357
          %s359 = sshll.u32 %s354, 4
          %363 = dma.hbm_to_vmem [thread:$0]  (%p350), %s356, %s359, %s358, %s337, 384, 384, 24
        $region44: #{tpu_custom_call.1} parent=35 // pred_fallthru
          _
      $region36: #{tpu_custom_call.1} parent=5 // pred_fallthru
        _
      %p364 = scmp.le.s32.totalorder 1, %s28
      %p365 = scmp.lt.s32.totalorder %s28, 4
      %p366 = pnand %p364, %p365
      %p367 = pneg %p366
      // Predicated region
      $region45: #{tpu_custom_call.1} parent=5 // pred_check
        _
      $region46: #{tpu_custom_call.1} parent=5 // pred_check_branch
        %369 = sbr.rel (%p366) target = $region48
      $region47: #{tpu_custom_call.1} parent=5 // pred_region
        %s370 = ssub.s32 %s28, 1
        %s371 = sand.u32 %s41, 1
        %s372 = scalar_lea.sflag [#allocation3], %s371
        %s373 = sand.u32 %s41, 1
        %s374 = smul.addr %s373, 128
        %s375 = scalar_lea.vmem [#allocation2], %s374
        // Predicated region
        $region49: #{tpu_custom_call.1} parent=47 // pred_check
          %p376 = pneg %p54
        $region50: #{tpu_custom_call.1} parent=47 // pred_check_branch
          %378 = sbr.rel (%p376) target = $region52
        $region51: #{tpu_custom_call.1} parent=47 // pred_region
          %380 = dma.done %s372, 2048
        $region52: #{tpu_custom_call.1} parent=47 // pred_fallthru
          _
        %s381 = sand.u32 %s33, 1
        %s382 = scalar_lea.sflag [#allocation6], %s381
        %s383 = sand.u32 %s67, 1
        %s384 = smul.addr %s383, 384
        %s385 = scalar_lea.vmem [#allocation5], %s384
        // Predicated region
        $region53: #{tpu_custom_call.1} parent=47 // pred_check
          %p386 = pneg %p80
        $region54: #{tpu_custom_call.1} parent=47 // pred_check_branch
          %388 = sbr.rel (%p386) target = $region56
        $region55: #{tpu_custom_call.1} parent=47 // pred_region
          %390 = dma.done %s382, 6144
        $region56: #{tpu_custom_call.1} parent=47 // pred_fallthru
          _
        // Predicated region
        $region57: #{tpu_custom_call.1} parent=47 // pred_check
          %p391 = pneg %p101
        $region58: #{tpu_custom_call.1} parent=47 // pred_check_branch
          %393 = sbr.rel (%p391) target = $region60
        $region59: #{tpu_custom_call.1} parent=47 // pred_region
          %395 = dma.done [#allocation6], 4096
        $region60: #{tpu_custom_call.1} parent=47 // pred_fallthru
          _
        // Predicated region
        $region61: #{tpu_custom_call.1} parent=47 // pred_check
          %p396 = pneg %p122
        $region62: #{tpu_custom_call.1} parent=47 // pred_check_branch
          %398 = sbr.rel (%p396) target = $region64
        $region63: #{tpu_custom_call.1} parent=47 // pred_region
          %400 = dma.done [#allocation9], 4096
        $region64: #{tpu_custom_call.1} parent=47 // pred_fallthru
          _
        // Predicated region
        $region65: #{tpu_custom_call.1} parent=47 // pred_check
          %p401 = pneg %p164
        $region66: #{tpu_custom_call.1} parent=47 // pred_check_branch
          %403 = sbr.rel (%p401) target = $region68
        $region67: #{tpu_custom_call.1} parent=47 // pred_region
          %405 = dma.done [#allocation9], 6144
        $region68: #{tpu_custom_call.1} parent=47 // pred_fallthru
          _
        %s406 = sand.u32 %s41, 1
        %s407 = scalar_lea.sflag [#allocation3], %s406
        %s408 = sand.u32 %s41, 1
        %s409 = smul.addr %s408, 128
        %s410 = scalar_lea.vmem [#allocation2], %s409
        %p411 = pneg %p54
        %p412 = pneg %p51
        %s413 = sand.u32 %s33, 1
        %s414 = scalar_lea.sflag [#allocation6], %s413
        %s415 = sand.u32 %s67, 1
        %s416 = smul.addr %s415, 384
        %s417 = scalar_lea.vmem [#allocation5], %s416
        %p418 = pneg %p80
        %p419 = pneg %p77
        %p420 = pneg %p101
        %p421 = pneg %p98
        %p422 = pneg %p122
        %p423 = pneg %p119
        %p424 = pneg %p143
        %p425 = pneg %p140
        %p426 = pneg %p164
        %p427 = pneg %p161
        %p428 = pneg %p185
        %p429 = pneg %p182
        %p430 = pneg %p211
        %p431 = pneg %p208
        %s432 = sand.u32 %s198, 1
        %s433 = scalar_lea.sflag [#allocation4], %s432
        %s434 = sand.u32 %s198, 1
        %s435 = smul.addr %s434, 128
        %s436 = scalar_lea.vmem [#allocation11], %s435
        %p437 = pneg %p237
        %p438 = pneg %p234
        %s439 = sand.u32 %s224, 1
        %s440 = scalar_lea.sflag [#allocation13], %s439
        %s441 = sand.u32 %s224, 1
        %s442 = smul.addr %s441, 384
        %s443 = scalar_lea.vmem [#allocation12], %s442
        %s444 = smul.u32 16, %s33
        %s445 = ssub.s32 38, %s444
        %p446 = scmp.lt.s32.totalorder %s445, 16
        %s447 = scalar_select %p446, %s445, 16
        %s448 = smul.u32 8, %s447
        %s449 = smul.u32 16, %s33
        %s450 = ssub.s32 38, %s449
        %p451 = scmp.lt.s32.totalorder %s450, 16
        %s452 = scalar_select %p451, %s450, 16
        %s453 = smul.u32 8, %s452
        %s454 = smul.u32 %s453, 3
        %s455 = smul.u32 16, %s33
        %s456 = ssub.s32 38, %s455
        %p457 = scmp.lt.s32.totalorder %s456, 16
        %s458 = scalar_select %p457, %s456, 16
        %s459 = smul.u32 8, %s458
        %s460 = smul.u32 16, %s33
        %s461 = ssub.s32 38, %s460
        %p462 = scmp.lt.s32.totalorder %s461, 16
        %s463 = scalar_select %p462, %s461, 16
        %s464 = smul.u32 8, %s463
        %s465 = smul.u32 %s464, 3
        %v466 = vld [vmem:[%s375] sm:$0xff]
        %v467 = vld [vmem:[%s375 + $0x8] sm:$0xff]
        %v468 = vld [vmem:[%s375 + $0x10] sm:$0xff]
        %v469 = vld [vmem:[%s375 + $0x18] sm:$0xff]
        %v470 = vld [vmem:[%s375 + $0x20] sm:$0xff]
        %v471 = vld [vmem:[%s375 + $0x28] sm:$0xff]
        %v472 = vld [vmem:[%s375 + $0x30] sm:$0xff]
        %v473 = vld [vmem:[%s375 + $0x38] sm:$0xff]
        %v474 = vld [vmem:[%s375 + $0x40] sm:$0xff]
        %v475 = vld [vmem:[%s375 + $0x48] sm:$0xff]
        %v476 = vld [vmem:[%s375 + $0x50] sm:$0xff]
        %v477 = vld [vmem:[%s375 + $0x58] sm:$0xff]
        %v478 = vld [vmem:[%s375 + $0x60] sm:$0xff]
        %v479 = vld [vmem:[%s375 + $0x68] sm:$0xff]
        %v480 = vld [vmem:[%s375 + $0x70] sm:$0xff]
        %v481 = vld [vmem:[%s375 + $0x78] sm:$0xff]
        %v482 = vld [vmem:[%s385] sm:$0xff]
        %v483 = vld [vmem:[%s385 + $0x8] sm:$0xff]
        %v484 = vld [vmem:[%s385 + $0x10] sm:$0xff]
        %v485 = vld [vmem:[%s385 + $0x18] sm:$0xff]
        %v486 = vld [vmem:[%s385 + $0x20] sm:$0xff]
        %v487 = vld [vmem:[%s385 + $0x28] sm:$0xff]
        %v488 = vld [vmem:[%s385 + $0x30] sm:$0xff]
        %v489 = vld [vmem:[%s385 + $0x38] sm:$0xff]
        %v490 = vld [vmem:[%s385 + $0x40] sm:$0xff]
        %v491 = vld [vmem:[%s385 + $0x48] sm:$0xff]
        %v492 = vld [vmem:[%s385 + $0x50] sm:$0xff]
        %v493 = vld [vmem:[%s385 + $0x58] sm:$0xff]
        %v494 = vld [vmem:[%s385 + $0x60] sm:$0xff]
        %v495 = vld [vmem:[%s385 + $0x68] sm:$0xff]
        %v496 = vld [vmem:[%s385 + $0x70] sm:$0xff]
        %v497 = vld [vmem:[%s385 + $0x78] sm:$0xff]
        %v498 = vld [vmem:[%s385 + $0x80] sm:$0xff]
        %v499 = vld [vmem:[%s385 + $0x88] sm:$0xff]
        %v500 = vld [vmem:[%s385 + $0x90] sm:$0xff]
        %v501 = vld [vmem:[%s385 + $0x98] sm:$0xff]
        %v502 = vld [vmem:[%s385 + $0xa0] sm:$0xff]
        %v503 = vld [vmem:[%s385 + $0xa8] sm:$0xff]
        %v504 = vld [vmem:[%s385 + $0xb0] sm:$0xff]
        %v505 = vld [vmem:[%s385 + $0xb8] sm:$0xff]
        %v506 = vld [vmem:[%s385 + $0xc0] sm:$0xff]
        %v507 = vld [vmem:[%s385 + $0xc8] sm:$0xff]
        %v508 = vld [vmem:[%s385 + $0xd0] sm:$0xff]
        %v509 = vld [vmem:[%s385 + $0xd8] sm:$0xff]
        %v510 = vld [vmem:[%s385 + $0xe0] sm:$0xff]
        %v511 = vld [vmem:[%s385 + $0xe8] sm:$0xff]
        %v512 = vld [vmem:[%s385 + $0xf0] sm:$0xff]
        %v513 = vld [vmem:[%s385 + $0xf8] sm:$0xff]
        %v514 = vld [vmem:[%s385 + $0x100] sm:$0xff]
        %v515 = vld [vmem:[%s385 + $0x108] sm:$0xff]
        %v516 = vld [vmem:[%s385 + $0x110] sm:$0xff]
        %v517 = vld [vmem:[%s385 + $0x118] sm:$0xff]
        %v518 = vld [vmem:[%s385 + $0x120] sm:$0xff]
        %v519 = vld [vmem:[%s385 + $0x128] sm:$0xff]
        %v520 = vld [vmem:[%s385 + $0x130] sm:$0xff]
        %v521 = vld [vmem:[%s385 + $0x138] sm:$0xff]
        %v522 = vld [vmem:[%s385 + $0x140] sm:$0xff]
        %v523 = vld [vmem:[%s385 + $0x148] sm:$0xff]
        %v524 = vld [vmem:[%s385 + $0x150] sm:$0xff]
        %v525 = vld [vmem:[%s385 + $0x158] sm:$0xff]
        %v526 = vld [vmem:[%s385 + $0x160] sm:$0xff]
        %v527 = vld [vmem:[%s385 + $0x168] sm:$0xff]
        %v528 = vld [vmem:[%s385 + $0x170] sm:$0xff]
        %v529 = vld [vmem:[%s385 + $0x178] sm:$0xff]
        %v530 = vld [vmem:[#allocation7] sm:$0xff]
        %v531 = vld [vmem:[#allocation7 + $0x8] sm:$0xff]
        %v532 = vld [vmem:[#allocation7 + $0x10] sm:$0xff]
        %v533 = vld [vmem:[#allocation7 + $0x18] sm:$0xff]
        %v534 = vld [vmem:[#allocation7 + $0x20] sm:$0xff]
        %v535 = vld [vmem:[#allocation7 + $0x28] sm:$0xff]
        %v536 = vld [vmem:[#allocation7 + $0x30] sm:$0xff]
        %v537 = vld [vmem:[#allocation7 + $0x38] sm:$0xff]
        %v538 = vld [vmem:[#allocation7 + $0x40] sm:$0xff]
        %v539 = vld [vmem:[#allocation7 + $0x48] sm:$0xff]
        %v540 = vld [vmem:[#allocation7 + $0x50] sm:$0xff]
        %v541 = vld [vmem:[#allocation7 + $0x58] sm:$0xff]
        %v542 = vld [vmem:[#allocation7 + $0x60] sm:$0xff]
        %v543 = vld [vmem:[#allocation7 + $0x68] sm:$0xff]
        %v544 = vld [vmem:[#allocation7 + $0x70] sm:$0xff]
        %v545 = vld [vmem:[#allocation7 + $0x78] sm:$0xff]
        %v546 = vld [vmem:[#allocation7 + $0x80] sm:$0xff]
        %v547 = vld [vmem:[#allocation7 + $0x88] sm:$0xff]
        %v548 = vld [vmem:[#allocation7 + $0x90] sm:$0xff]
        %v549 = vld [vmem:[#allocation7 + $0x98] sm:$0xff]
        %v550 = vld [vmem:[#allocation7 + $0xa0] sm:$0xff]
        %v551 = vld [vmem:[#allocation7 + $0xa8] sm:$0xff]
        %v552 = vld [vmem:[#allocation7 + $0xb0] sm:$0xff]
        %v553 = vld [vmem:[#allocation7 + $0xb8] sm:$0xff]
        %v554 = vld [vmem:[#allocation7 + $0xc0] sm:$0xff]
        %v555 = vld [vmem:[#allocation7 + $0xc8] sm:$0xff]
        %v556 = vld [vmem:[#allocation7 + $0xd0] sm:$0xff]
        %v557 = vld [vmem:[#allocation7 + $0xd8] sm:$0xff]
        %v558 = vld [vmem:[#allocation7 + $0xe0] sm:$0xff]
        %v559 = vld [vmem:[#allocation7 + $0xe8] sm:$0xff]
        %v560 = vld [vmem:[#allocation7 + $0xf0] sm:$0xff]
        %v561 = vld [vmem:[#allocation7 + $0xf8] sm:$0xff]
        %562 = vmatpush.msra.mxu0 %v560
        %563 = vmatpush.msra.mxu0 %v558
        %564 = vmatpush.msra.mxu0 %v556
        %565 = vmatpush.msra.mxu0 %v554
        %566 = vmatpush.msra.mxu0 %v552
        %567 = vmatpush.msra.mxu0 %v550
        %568 = vmatpush.msra.mxu0 %v548
        %569 = vmatpush.msra.mxu0 %v546
        %570 = vmatpush.msra.mxu0 %v544
        %571 = vmatpush.msra.mxu0 %v542
        %572 = vmatpush.msra.mxu0 %v540
        %573 = vmatpush.msra.mxu0 %v538
        %574 = vmatpush.msra.mxu0 %v536
        %575 = vmatpush.msra.mxu0 %v534
        %576 = vmatpush.msra.mxu0 %v532
        %577 = vmatpush.msra.mxu0 %v530
        %578 = vmatmul.f32.gmra.mxu0 %v482
        %v579 = vpop.f32.mrf.mxu0
        %v580 = vadd.f32 0.0, %v579
        %581 = vmatmul.f32.gmra.mxu0 %v485
        %v582 = vpop.f32.mrf.mxu0
        %v583 = vadd.f32 0.0, %v582
        %584 = vmatmul.f32.gmra.mxu0 %v488
        %v585 = vpop.f32.mrf.mxu0
        %v586 = vadd.f32 0.0, %v585
        %587 = vmatmul.f32.gmra.mxu0 %v491
        %v588 = vpop.f32.mrf.mxu0
        %v589 = vadd.f32 0.0, %v588
        %590 = vmatmul.f32.gmra.mxu0 %v494
        %v591 = vpop.f32.mrf.mxu0
        %v592 = vadd.f32 0.0, %v591
        %593 = vmatmul.f32.gmra.mxu0 %v497
        %v594 = vpop.f32.mrf.mxu0
        %v595 = vadd.f32 0.0, %v594
        %596 = vmatmul.f32.gmra.mxu0 %v500
        %v597 = vpop.f32.mrf.mxu0
        %v598 = vadd.f32 0.0, %v597
        %599 = vmatmul.f32.gmra.mxu0 %v503
        %v600 = vpop.f32.mrf.mxu0
        %v601 = vadd.f32 0.0, %v600
        %602 = vmatmul.f32.gmra.mxu0 %v506
        %v603 = vpop.f32.mrf.mxu0
        %v604 = vadd.f32 0.0, %v603
        %605 = vmatmul.f32.gmra.mxu0 %v509
        %v606 = vpop.f32.mrf.mxu0
        %v607 = vadd.f32 0.0, %v606
        %608 = vmatmul.f32.gmra.mxu0 %v512
        %v609 = vpop.f32.mrf.mxu0
        %v610 = vadd.f32 0.0, %v609
        %611 = vmatmul.f32.gmra.mxu0 %v515
        %v612 = vpop.f32.mrf.mxu0
        %v613 = vadd.f32 0.0, %v612
        %614 = vmatmul.f32.gmra.mxu0 %v518
        %v615 = vpop.f32.mrf.mxu0
        %v616 = vadd.f32 0.0, %v615
        %617 = vmatmul.f32.gmra.mxu0 %v521
        %v618 = vpop.f32.mrf.mxu0
        %v619 = vadd.f32 0.0, %v618
        %620 = vmatmul.f32.gmra.mxu0 %v524
        %v621 = vpop.f32.mrf.mxu0
        %v622 = vadd.f32 0.0, %v621
        %623 = vmatmul.f32.gmra.mxu0 %v527
        %v624 = vpop.f32.mrf.mxu0
        %v625 = vadd.f32 0.0, %v624
        %626 = vdwg.mxu0
        %627 = vmatpush.msra.mxu0 %v561
        %628 = vmatpush.msra.mxu0 %v559
        %629 = vmatpush.msra.mxu0 %v557
        %630 = vmatpush.msra.mxu0 %v555
        %631 = vmatpush.msra.mxu0 %v553
        %632 = vmatpush.msra.mxu0 %v551
        %633 = vmatpush.msra.mxu0 %v549
        %634 = vmatpush.msra.mxu0 %v547
        %635 = vmatpush.msra.mxu0 %v545
        %636 = vmatpush.msra.mxu0 %v543
        %637 = vmatpush.msra.mxu0 %v541
        %638 = vmatpush.msra.mxu0 %v539
        %639 = vmatpush.msra.mxu0 %v537
        %640 = vmatpush.msra.mxu0 %v535
        %641 = vmatpush.msra.mxu0 %v533
        %642 = vmatpush.msra.mxu0 %v531
        %643 = vmatmul.f32.gmra.mxu0 %v482
        %v644 = vpop.f32.mrf.mxu0
        %v645 = vadd.f32 0.0, %v644
        %646 = vmatmul.f32.gmra.mxu0 %v485
        %v647 = vpop.f32.mrf.mxu0
        %v648 = vadd.f32 0.0, %v647
        %649 = vmatmul.f32.gmra.mxu0 %v488
        %v650 = vpop.f32.mrf.mxu0
        %v651 = vadd.f32 0.0, %v650
        %652 = vmatmul.f32.gmra.mxu0 %v491
        %v653 = vpop.f32.mrf.mxu0
        %v654 = vadd.f32 0.0, %v653
        %655 = vmatmul.f32.gmra.mxu0 %v494
        %v656 = vpop.f32.mrf.mxu0
        %v657 = vadd.f32 0.0, %v656
        %658 = vmatmul.f32.gmra.mxu0 %v497
        %v659 = vpop.f32.mrf.mxu0
        %v660 = vadd.f32 0.0, %v659
        %661 = vmatmul.f32.gmra.mxu0 %v500
        %v662 = vpop.f32.mrf.mxu0
        %v663 = vadd.f32 0.0, %v662
        %664 = vmatmul.f32.gmra.mxu0 %v503
        %v665 = vpop.f32.mrf.mxu0
        %v666 = vadd.f32 0.0, %v665
        %667 = vmatmul.f32.gmra.mxu0 %v506
        %v668 = vpop.f32.mrf.mxu0
        %v669 = vadd.f32 0.0, %v668
        %670 = vmatmul.f32.gmra.mxu0 %v509
        %v671 = vpop.f32.mrf.mxu0
        %v672 = vadd.f32 0.0, %v671
        %673 = vmatmul.f32.gmra.mxu0 %v512
        %v674 = vpop.f32.mrf.mxu0
        %v675 = vadd.f32 0.0, %v674
        %676 = vmatmul.f32.gmra.mxu0 %v515
        %v677 = vpop.f32.mrf.mxu0
        %v678 = vadd.f32 0.0, %v677
        %679 = vmatmul.f32.gmra.mxu0 %v518
        %v680 = vpop.f32.mrf.mxu0
        %v681 = vadd.f32 0.0, %v680
        %682 = vmatmul.f32.gmra.mxu0 %v521
        %v683 = vpop.f32.mrf.mxu0
        %v684 = vadd.f32 0.0, %v683
        %685 = vmatmul.f32.gmra.mxu0 %v524
        %v686 = vpop.f32.mrf.mxu0
        %v687 = vadd.f32 0.0, %v686
        %688 = vmatmul.f32.gmra.mxu0 %v527
        %v689 = vpop.f32.mrf.mxu0
        %v690 = vadd.f32 0.0, %v689
        %691 = vdwg.mxu0
        %692 = vmatpush.msra.mxu0 %v560
        %693 = vmatpush.msra.mxu0 %v558
        %694 = vmatpush.msra.mxu0 %v556
        %695 = vmatpush.msra.mxu0 %v554
        %696 = vmatpush.msra.mxu0 %v552
        %697 = vmatpush.msra.mxu0 %v550
        %698 = vmatpush.msra.mxu0 %v548
        %699 = vmatpush.msra.mxu0 %v546
        %700 = vmatpush.msra.mxu0 %v544
        %701 = vmatpush.msra.mxu0 %v542
        %702 = vmatpush.msra.mxu0 %v540
        %703 = vmatpush.msra.mxu0 %v538
        %704 = vmatpush.msra.mxu0 %v536
        %705 = vmatpush.msra.mxu0 %v534
        %706 = vmatpush.msra.mxu0 %v532
        %707 = vmatpush.msra.mxu0 %v530
        %708 = vmatmul.f32.gmra.mxu0 %v483
        %v709 = vpop.f32.mrf.mxu0
        %v710 = vadd.f32 0.0, %v709
        %711 = vmatmul.f32.gmra.mxu0 %v486
        %v712 = vpop.f32.mrf.mxu0
        %v713 = vadd.f32 0.0, %v712
        %714 = vmatmul.f32.gmra.mxu0 %v489
        %v715 = vpop.f32.mrf.mxu0
        %v716 = vadd.f32 0.0, %v715
        %717 = vmatmul.f32.gmra.mxu0 %v492
        %v718 = vpop.f32.mrf.mxu0
        %v719 = vadd.f32 0.0, %v718
        %720 = vmatmul.f32.gmra.mxu0 %v495
        %v721 = vpop.f32.mrf.mxu0
        %v722 = vadd.f32 0.0, %v721
        %723 = vmatmul.f32.gmra.mxu0 %v498
        %v724 = vpop.f32.mrf.mxu0
        %v725 = vadd.f32 0.0, %v724
        %726 = vmatmul.f32.gmra.mxu0 %v501
        %v727 = vpop.f32.mrf.mxu0
        %v728 = vadd.f32 0.0, %v727
        %729 = vmatmul.f32.gmra.mxu0 %v504
        %v730 = vpop.f32.mrf.mxu0
        %v731 = vadd.f32 0.0, %v730
        %732 = vmatmul.f32.gmra.mxu0 %v507
        %v733 = vpop.f32.mrf.mxu0
        %v734 = vadd.f32 0.0, %v733
        %735 = vmatmul.f32.gmra.mxu0 %v510
        %v736 = vpop.f32.mrf.mxu0
        %v737 = vadd.f32 0.0, %v736
        %738 = vmatmul.f32.gmra.mxu0 %v513
        %v739 = vpop.f32.mrf.mxu0
        %v740 = vadd.f32 0.0, %v739
        %741 = vmatmul.f32.gmra.mxu0 %v516
        %v742 = vpop.f32.mrf.mxu0
        %v743 = vadd.f32 0.0, %v742
        %744 = vmatmul.f32.gmra.mxu0 %v519
        %v745 = vpop.f32.mrf.mxu0
        %v746 = vadd.f32 0.0, %v745
        %747 = vmatmul.f32.gmra.mxu0 %v522
        %v748 = vpop.f32.mrf.mxu0
        %v749 = vadd.f32 0.0, %v748
        %750 = vmatmul.f32.gmra.mxu0 %v525
        %v751 = vpop.f32.mrf.mxu0
        %v752 = vadd.f32 0.0, %v751
        %753 = vmatmul.f32.gmra.mxu0 %v528
        %v754 = vpop.f32.mrf.mxu0
        %v755 = vadd.f32 0.0, %v754
        %756 = vdwg.mxu0
        %757 = vmatpush.msra.mxu0 %v561
        %758 = vmatpush.msra.mxu0 %v559
        %759 = vmatpush.msra.mxu0 %v557
        %760 = vmatpush.msra.mxu0 %v555
        %761 = vmatpush.msra.mxu0 %v553
        %762 = vmatpush.msra.mxu0 %v551
        %763 = vmatpush.msra.mxu0 %v549
        %764 = vmatpush.msra.mxu0 %v547
        %765 = vmatpush.msra.mxu0 %v545
        %766 = vmatpush.msra.mxu0 %v543
        %767 = vmatpush.msra.mxu0 %v541
        %768 = vmatpush.msra.mxu0 %v539
        %769 = vmatpush.msra.mxu0 %v537
        %770 = vmatpush.msra.mxu0 %v535
        %771 = vmatpush.msra.mxu0 %v533
        %772 = vmatpush.msra.mxu0 %v531
        %773 = vmatmul.f32.gmra.mxu0 %v483
        %v774 = vpop.f32.mrf.mxu0
        %v775 = vadd.f32 0.0, %v774
        %776 = vmatmul.f32.gmra.mxu0 %v486
        %v777 = vpop.f32.mrf.mxu0
        %v778 = vadd.f32 0.0, %v777
        %779 = vmatmul.f32.gmra.mxu0 %v489
        %v780 = vpop.f32.mrf.mxu0
        %v781 = vadd.f32 0.0, %v780
        %782 = vmatmul.f32.gmra.mxu0 %v492
        %v783 = vpop.f32.mrf.mxu0
        %v784 = vadd.f32 0.0, %v783
        %785 = vmatmul.f32.gmra.mxu0 %v495
        %v786 = vpop.f32.mrf.mxu0
        %v787 = vadd.f32 0.0, %v786
        %788 = vmatmul.f32.gmra.mxu0 %v498
        %v789 = vpop.f32.mrf.mxu0
        %v790 = vadd.f32 0.0, %v789
        %791 = vmatmul.f32.gmra.mxu0 %v501
        %v792 = vpop.f32.mrf.mxu0
        %v793 = vadd.f32 0.0, %v792
        %794 = vmatmul.f32.gmra.mxu0 %v504
        %v795 = vpop.f32.mrf.mxu0
        %v796 = vadd.f32 0.0, %v795
        %797 = vmatmul.f32.gmra.mxu0 %v507
        %v798 = vpop.f32.mrf.mxu0
        %v799 = vadd.f32 0.0, %v798
        %800 = vmatmul.f32.gmra.mxu0 %v510
        %v801 = vpop.f32.mrf.mxu0
        %v802 = vadd.f32 0.0, %v801
        %803 = vmatmul.f32.gmra.mxu0 %v513
        %v804 = vpop.f32.mrf.mxu0
        %v805 = vadd.f32 0.0, %v804
        %806 = vmatmul.f32.gmra.mxu0 %v516
        %v807 = vpop.f32.mrf.mxu0
        %v808 = vadd.f32 0.0, %v807
        %809 = vmatmul.f32.gmra.mxu0 %v519
        %v810 = vpop.f32.mrf.mxu0
        %v811 = vadd.f32 0.0, %v810
        %812 = vmatmul.f32.gmra.mxu0 %v522
        %v813 = vpop.f32.mrf.mxu0
        %v814 = vadd.f32 0.0, %v813
        %815 = vmatmul.f32.gmra.mxu0 %v525
        %v816 = vpop.f32.mrf.mxu0
        %v817 = vadd.f32 0.0, %v816
        %818 = vmatmul.f32.gmra.mxu0 %v528
        %v819 = vpop.f32.mrf.mxu0
        %v820 = vadd.f32 0.0, %v819
        %821 = vdwg.mxu0
        %822 = vmatpush.msra.mxu0 %v560
        %823 = vmatpush.msra.mxu0 %v558
        %824 = vmatpush.msra.mxu0 %v556
        %825 = vmatpush.msra.mxu0 %v554
        %826 = vmatpush.msra.mxu0 %v552
        %827 = vmatpush.msra.mxu0 %v550
        %828 = vmatpush.msra.mxu0 %v548
        %829 = vmatpush.msra.mxu0 %v546
        %830 = vmatpush.msra.mxu0 %v544
        %831 = vmatpush.msra.mxu0 %v542
        %832 = vmatpush.msra.mxu0 %v540
        %833 = vmatpush.msra.mxu0 %v538
        %834 = vmatpush.msra.mxu0 %v536
        %835 = vmatpush.msra.mxu0 %v534
        %836 = vmatpush.msra.mxu0 %v532
        %837 = vmatpush.msra.mxu0 %v530
        %838 = vmatmul.f32.gmra.mxu0 %v484
        %v839 = vpop.f32.mrf.mxu0
        %v840 = vadd.f32 0.0, %v839
        %841 = vmatmul.f32.gmra.mxu0 %v487
        %v842 = vpop.f32.mrf.mxu0
        %v843 = vadd.f32 0.0, %v842
        %844 = vmatmul.f32.gmra.mxu0 %v490
        %v845 = vpop.f32.mrf.mxu0
        %v846 = vadd.f32 0.0, %v845
        %847 = vmatmul.f32.gmra.mxu0 %v493
        %v848 = vpop.f32.mrf.mxu0
        %v849 = vadd.f32 0.0, %v848
        %850 = vmatmul.f32.gmra.mxu0 %v496
        %v851 = vpop.f32.mrf.mxu0
        %v852 = vadd.f32 0.0, %v851
        %853 = vmatmul.f32.gmra.mxu0 %v499
        %v854 = vpop.f32.mrf.mxu0
        %v855 = vadd.f32 0.0, %v854
        %856 = vmatmul.f32.gmra.mxu0 %v502
        %v857 = vpop.f32.mrf.mxu0
        %v858 = vadd.f32 0.0, %v857
        %859 = vmatmul.f32.gmra.mxu0 %v505
        %v860 = vpop.f32.mrf.mxu0
        %v861 = vadd.f32 0.0, %v860
        %862 = vmatmul.f32.gmra.mxu0 %v508
        %v863 = vpop.f32.mrf.mxu0
        %v864 = vadd.f32 0.0, %v863
        %865 = vmatmul.f32.gmra.mxu0 %v511
        %v866 = vpop.f32.mrf.mxu0
        %v867 = vadd.f32 0.0, %v866
        %868 = vmatmul.f32.gmra.mxu0 %v514
        %v869 = vpop.f32.mrf.mxu0
        %v870 = vadd.f32 0.0, %v869
        %871 = vmatmul.f32.gmra.mxu0 %v517
        %v872 = vpop.f32.mrf.mxu0
        %v873 = vadd.f32 0.0, %v872
        %874 = vmatmul.f32.gmra.mxu0 %v520
        %v875 = vpop.f32.mrf.mxu0
        %v876 = vadd.f32 0.0, %v875
        %877 = vmatmul.f32.gmra.mxu0 %v523
        %v878 = vpop.f32.mrf.mxu0
        %v879 = vadd.f32 0.0, %v878
        %880 = vmatmul.f32.gmra.mxu0 %v526
        %v881 = vpop.f32.mrf.mxu0
        %v882 = vadd.f32 0.0, %v881
        %883 = vmatmul.f32.gmra.mxu0 %v529
        %v884 = vpop.f32.mrf.mxu0
        %v885 = vadd.f32 0.0, %v884
        %886 = vdwg.mxu0
        %887 = vmatpush.msra.mxu0 %v561
        %888 = vmatpush.msra.mxu0 %v559
        %889 = vmatpush.msra.mxu0 %v557
        %890 = vmatpush.msra.mxu0 %v555
        %891 = vmatpush.msra.mxu0 %v553
        %892 = vmatpush.msra.mxu0 %v551
        %893 = vmatpush.msra.mxu0 %v549
        %894 = vmatpush.msra.mxu0 %v547
        %895 = vmatpush.msra.mxu0 %v545
        %896 = vmatpush.msra.mxu0 %v543
        %897 = vmatpush.msra.mxu0 %v541
        %898 = vmatpush.msra.mxu0 %v539
        %899 = vmatpush.msra.mxu0 %v537
        %900 = vmatpush.msra.mxu0 %v535
        %901 = vmatpush.msra.mxu0 %v533
        %902 = vmatpush.msra.mxu0 %v531
        %903 = vmatmul.f32.gmra.mxu0 %v484
        %v904 = vpop.f32.mrf.mxu0
        %v905 = vadd.f32 0.0, %v904
        %906 = vmatmul.f32.gmra.mxu0 %v487
        %v907 = vpop.f32.mrf.mxu0
        %v908 = vadd.f32 0.0, %v907
        %909 = vmatmul.f32.gmra.mxu0 %v490
        %v910 = vpop.f32.mrf.mxu0
        %v911 = vadd.f32 0.0, %v910
        %912 = vmatmul.f32.gmra.mxu0 %v493
        %v913 = vpop.f32.mrf.mxu0
        %v914 = vadd.f32 0.0, %v913
        %915 = vmatmul.f32.gmra.mxu0 %v496
        %v916 = vpop.f32.mrf.mxu0
        %v917 = vadd.f32 0.0, %v916
        %918 = vmatmul.f32.gmra.mxu0 %v499
        %v919 = vpop.f32.mrf.mxu0
        %v920 = vadd.f32 0.0, %v919
        %921 = vmatmul.f32.gmra.mxu0 %v502
        %v922 = vpop.f32.mrf.mxu0
        %v923 = vadd.f32 0.0, %v922
        %924 = vmatmul.f32.gmra.mxu0 %v505
        %v925 = vpop.f32.mrf.mxu0
        %v926 = vadd.f32 0.0, %v925
        %927 = vmatmul.f32.gmra.mxu0 %v508
        %v928 = vpop.f32.mrf.mxu0
        %v929 = vadd.f32 0.0, %v928
        %930 = vmatmul.f32.gmra.mxu0 %v511
        %v931 = vpop.f32.mrf.mxu0
        %v932 = vadd.f32 0.0, %v931
        %933 = vmatmul.f32.gmra.mxu0 %v514
        %v934 = vpop.f32.mrf.mxu0
        %v935 = vadd.f32 0.0, %v934
        %936 = vmatmul.f32.gmra.mxu0 %v517
        %v937 = vpop.f32.mrf.mxu0
        %v938 = vadd.f32 0.0, %v937
        %939 = vmatmul.f32.gmra.mxu0 %v520
        %v940 = vpop.f32.mrf.mxu0
        %v941 = vadd.f32 0.0, %v940
        %942 = vmatmul.f32.gmra.mxu0 %v523
        %v943 = vpop.f32.mrf.mxu0
        %v944 = vadd.f32 0.0, %v943
        %945 = vmatmul.f32.gmra.mxu0 %v526
        %v946 = vpop.f32.mrf.mxu0
        %v947 = vadd.f32 0.0, %v946
        %948 = vmatmul.f32.gmra.mxu0 %v529
        %v949 = vpop.f32.mrf.mxu0
        %v950 = vadd.f32 0.0, %v949
        %951 = vdwg.mxu0
        %v952 = vand.u32 2147483647, %v580
        %v953 = vand.u32 2147483647, %v583
        %v954 = vand.u32 2147483647, %v586
        %v955 = vand.u32 2147483647, %v589
        %v956 = vand.u32 2147483647, %v592
        %v957 = vand.u32 2147483647, %v595
        %v958 = vand.u32 2147483647, %v598
        %v959 = vand.u32 2147483647, %v601
        %v960 = vand.u32 2147483647, %v604
        %v961 = vand.u32 2147483647, %v607
        %v962 = vand.u32 2147483647, %v610
        %v963 = vand.u32 2147483647, %v613
        %v964 = vand.u32 2147483647, %v616
        %v965 = vand.u32 2147483647, %v619
        %v966 = vand.u32 2147483647, %v622
        %v967 = vand.u32 2147483647, %v625
        %v968 = vand.u32 2147483647, %v710
        %v969 = vand.u32 2147483647, %v713
        %v970 = vand.u32 2147483647, %v716
        %v971 = vand.u32 2147483647, %v719
        %v972 = vand.u32 2147483647, %v722
        %v973 = vand.u32 2147483647, %v725
        %v974 = vand.u32 2147483647, %v728
        %v975 = vand.u32 2147483647, %v731
        %v976 = vand.u32 2147483647, %v734
        %v977 = vand.u32 2147483647, %v737
        %v978 = vand.u32 2147483647, %v740
        %v979 = vand.u32 2147483647, %v743
        %v980 = vand.u32 2147483647, %v746
        %v981 = vand.u32 2147483647, %v749
        %v982 = vand.u32 2147483647, %v752
        %v983 = vand.u32 2147483647, %v755
        %v984 = vadd.f32 %v952, %v968
        %v985 = vadd.f32 %v953, %v969
        %v986 = vadd.f32 %v954, %v970
        %v987 = vadd.f32 %v955, %v971
        %v988 = vadd.f32 %v956, %v972
        %v989 = vadd.f32 %v957, %v973
        %v990 = vadd.f32 %v958, %v974
        %v991 = vadd.f32 %v959, %v975
        %v992 = vadd.f32 %v960, %v976
        %v993 = vadd.f32 %v961, %v977
        %v994 = vadd.f32 %v962, %v978
        %v995 = vadd.f32 %v963, %v979
        %v996 = vadd.f32 %v964, %v980
        %v997 = vadd.f32 %v965, %v981
        %v998 = vadd.f32 %v966, %v982
        %v999 = vadd.f32 %v967, %v983
        %v1000 = vand.u32 2147483647, %v840
        %v1001 = vand.u32 2147483647, %v843
        %v1002 = vand.u32 2147483647, %v846
        %v1003 = vand.u32 2147483647, %v849
        %v1004 = vand.u32 2147483647, %v852
        %v1005 = vand.u32 2147483647, %v855
        %v1006 = vand.u32 2147483647, %v858
        %v1007 = vand.u32 2147483647, %v861
        %v1008 = vand.u32 2147483647, %v864
        %v1009 = vand.u32 2147483647, %v867
        %v1010 = vand.u32 2147483647, %v870
        %v1011 = vand.u32 2147483647, %v873
        %v1012 = vand.u32 2147483647, %v876
        %v1013 = vand.u32 2147483647, %v879
        %v1014 = vand.u32 2147483647, %v882
        %v1015 = vand.u32 2147483647, %v885
        %v1016 = vadd.f32 %v984, %v1000
        %v1017 = vadd.f32 %v985, %v1001
        %v1018 = vadd.f32 %v986, %v1002
        %v1019 = vadd.f32 %v987, %v1003
        %v1020 = vadd.f32 %v988, %v1004
        %v1021 = vadd.f32 %v989, %v1005
        %v1022 = vadd.f32 %v990, %v1006
        %v1023 = vadd.f32 %v991, %v1007
        %v1024 = vadd.f32 %v992, %v1008
        %v1025 = vadd.f32 %v993, %v1009
        %v1026 = vadd.f32 %v994, %v1010
        %v1027 = vadd.f32 %v995, %v1011
        %v1028 = vadd.f32 %v996, %v1012
        %v1029 = vadd.f32 %v997, %v1013
        %v1030 = vadd.f32 %v998, %v1014
        %v1031 = vadd.f32 %v999, %v1015
        %v1032 = vmul.f32 %v580, %v645
        %v1033 = vmul.f32 %v583, %v648
        %v1034 = vmul.f32 %v586, %v651
        %v1035 = vmul.f32 %v589, %v654
        %v1036 = vmul.f32 %v592, %v657
        %v1037 = vmul.f32 %v595, %v660
        %v1038 = vmul.f32 %v598, %v663
        %v1039 = vmul.f32 %v601, %v666
        %v1040 = vmul.f32 %v604, %v669
        %v1041 = vmul.f32 %v607, %v672
        %v1042 = vmul.f32 %v610, %v675
        %v1043 = vmul.f32 %v613, %v678
        %v1044 = vmul.f32 %v616, %v681
        %v1045 = vmul.f32 %v619, %v684
        %v1046 = vmul.f32 %v622, %v687
        %v1047 = vmul.f32 %v625, %v690
        %v1048 = vmul.f32 %v710, %v775
        %v1049 = vmul.f32 %v713, %v778
        %v1050 = vmul.f32 %v716, %v781
        %v1051 = vmul.f32 %v719, %v784
        %v1052 = vmul.f32 %v722, %v787
        %v1053 = vmul.f32 %v725, %v790
        %v1054 = vmul.f32 %v728, %v793
        %v1055 = vmul.f32 %v731, %v796
        %v1056 = vmul.f32 %v734, %v799
        %v1057 = vmul.f32 %v737, %v802
        %v1058 = vmul.f32 %v740, %v805
        %v1059 = vmul.f32 %v743, %v808
        %v1060 = vmul.f32 %v746, %v811
        %v1061 = vmul.f32 %v749, %v814
        %v1062 = vmul.f32 %v752, %v817
        %v1063 = vmul.f32 %v755, %v820
        %v1064 = vadd.f32 %v1032, %v1048
        %v1065 = vadd.f32 %v1033, %v1049
        %v1066 = vadd.f32 %v1034, %v1050
        %v1067 = vadd.f32 %v1035, %v1051
        %v1068 = vadd.f32 %v1036, %v1052
        %v1069 = vadd.f32 %v1037, %v1053
        %v1070 = vadd.f32 %v1038, %v1054
        %v1071 = vadd.f32 %v1039, %v1055
        %v1072 = vadd.f32 %v1040, %v1056
        %v1073 = vadd.f32 %v1041, %v1057
        %v1074 = vadd.f32 %v1042, %v1058
        %v1075 = vadd.f32 %v1043, %v1059
        %v1076 = vadd.f32 %v1044, %v1060
        %v1077 = vadd.f32 %v1045, %v1061
        %v1078 = vadd.f32 %v1046, %v1062
        %v1079 = vadd.f32 %v1047, %v1063
        %v1080 = vmul.f32 %v840, %v905
        %v1081 = vmul.f32 %v843, %v908
        %v1082 = vmul.f32 %v846, %v911
        %v1083 = vmul.f32 %v849, %v914
        %v1084 = vmul.f32 %v852, %v917
        %v1085 = vmul.f32 %v855, %v920
        %v1086 = vmul.f32 %v858, %v923
        %v1087 = vmul.f32 %v861, %v926
        %v1088 = vmul.f32 %v864, %v929
        %v1089 = vmul.f32 %v867, %v932
        %v1090 = vmul.f32 %v870, %v935
        %v1091 = vmul.f32 %v873, %v938
        %v1092 = vmul.f32 %v876, %v941
        %v1093 = vmul.f32 %v879, %v944
        %v1094 = vmul.f32 %v882, %v947
        %v1095 = vmul.f32 %v885, %v950
        %v1096 = vadd.f32 %v1064, %v1080
        %v1097 = vadd.f32 %v1065, %v1081
        %v1098 = vadd.f32 %v1066, %v1082
        %v1099 = vadd.f32 %v1067, %v1083
        %v1100 = vadd.f32 %v1068, %v1084
        %v1101 = vadd.f32 %v1069, %v1085
        %v1102 = vadd.f32 %v1070, %v1086
        %v1103 = vadd.f32 %v1071, %v1087
        %v1104 = vadd.f32 %v1072, %v1088
        %v1105 = vadd.f32 %v1073, %v1089
        %v1106 = vadd.f32 %v1074, %v1090
        %v1107 = vadd.f32 %v1075, %v1091
        %v1108 = vadd.f32 %v1076, %v1092
        %v1109 = vadd.f32 %v1077, %v1093
        %v1110 = vadd.f32 %v1078, %v1094
        %v1111 = vadd.f32 %v1079, %v1095
        %v1112 = vmul.f32 %v1096, 0.088388346
        %v1113 = vmul.f32 %v1097, 0.088388346
        %v1114 = vmul.f32 %v1098, 0.088388346
        %v1115 = vmul.f32 %v1099, 0.088388346
        %v1116 = vmul.f32 %v1100, 0.088388346
        %v1117 = vmul.f32 %v1101, 0.088388346
        %v1118 = vmul.f32 %v1102, 0.088388346
        %v1119 = vmul.f32 %v1103, 0.088388346
        %v1120 = vmul.f32 %v1104, 0.088388346
        %v1121 = vmul.f32 %v1105, 0.088388346
        %v1122 = vmul.f32 %v1106, 0.088388346
        %v1123 = vmul.f32 %v1107, 0.088388346
        %v1124 = vmul.f32 %v1108, 0.088388346
        %v1125 = vmul.f32 %v1109, 0.088388346
        %v1126 = vmul.f32 %v1110, 0.088388346
        %v1127 = vmul.f32 %v1111, 0.088388346
        %v1128 = vld [vmem:[#allocation8] sm:$0xff]
        %v1129 = vld [vmem:[#allocation8 + $0x8] sm:$0xff]
        %v1130 = vld [vmem:[#allocation8 + $0x10] sm:$0xff]
        %v1131 = vld [vmem:[#allocation8 + $0x18] sm:$0xff]
        %v1132 = vld [vmem:[#allocation8 + $0x20] sm:$0xff]
        %v1133 = vld [vmem:[#allocation8 + $0x28] sm:$0xff]
        %v1134 = vld [vmem:[#allocation8 + $0x30] sm:$0xff]
        %v1135 = vld [vmem:[#allocation8 + $0x38] sm:$0xff]
        %v1136 = vld [vmem:[#allocation8 + $0x40] sm:$0xff]
        %v1137 = vld [vmem:[#allocation8 + $0x48] sm:$0xff]
        %v1138 = vld [vmem:[#allocation8 + $0x50] sm:$0xff]
        %v1139 = vld [vmem:[#allocation8 + $0x58] sm:$0xff]
        %v1140 = vld [vmem:[#allocation8 + $0x60] sm:$0xff]
        %v1141 = vld [vmem:[#allocation8 + $0x68] sm:$0xff]
        %v1142 = vld [vmem:[#allocation8 + $0x70] sm:$0xff]
        %v1143 = vld [vmem:[#allocation8 + $0x78] sm:$0xff]
        %v1144 = vld [vmem:[#allocation8 + $0x80] sm:$0xff]
        %v1145 = vld [vmem:[#allocation8 + $0x88] sm:$0xff]
        %v1146 = vld [vmem:[#allocation8 + $0x90] sm:$0xff]
        %v1147 = vld [vmem:[#allocation8 + $0x98] sm:$0xff]
        %v1148 = vld [vmem:[#allocation8 + $0xa0] sm:$0xff]
        %v1149 = vld [vmem:[#allocation8 + $0xa8] sm:$0xff]
        %v1150 = vld [vmem:[#allocation8 + $0xb0] sm:$0xff]
        %v1151 = vld [vmem:[#allocation8 + $0xb8] sm:$0xff]
        %v1152 = vld [vmem:[#allocation8 + $0xc0] sm:$0xff]
        %v1153 = vld [vmem:[#allocation8 + $0xc8] sm:$0xff]
        %v1154 = vld [vmem:[#allocation8 + $0xd0] sm:$0xff]
        %v1155 = vld [vmem:[#allocation8 + $0xd8] sm:$0xff]
        %v1156 = vld [vmem:[#allocation8 + $0xe0] sm:$0xff]
        %v1157 = vld [vmem:[#allocation8 + $0xe8] sm:$0xff]
        %v1158 = vld [vmem:[#allocation8 + $0xf0] sm:$0xff]
        %v1159 = vld [vmem:[#allocation8 + $0xf8] sm:$0xff]
        %v1160 = vld [vmem:[%s4] sm:$0x1]
        %v1162 = vperm.slane %v1160, 0
        %1164 = vmatpush.msra.mxu0 %v1143
        %1165 = vmatpush.msra.mxu0 %v1142
        %1166 = vmatpush.msra.mxu0 %v1141
        %1167 = vmatpush.msra.mxu0 %v1140
        %1168 = vmatpush.msra.mxu0 %v1139
        %1169 = vmatpush.msra.mxu0 %v1138
        %1170 = vmatpush.msra.mxu0 %v1137
        %1171 = vmatpush.msra.mxu0 %v1136
        %1172 = vmatpush.msra.mxu0 %v1135
        %1173 = vmatpush.msra.mxu0 %v1134
        %1174 = vmatpush.msra.mxu0 %v1133
        %1175 = vmatpush.msra.mxu0 %v1132
        %1176 = vmatpush.msra.mxu0 %v1131
        %1177 = vmatpush.msra.mxu0 %v1130
        %1178 = vmatpush.msra.mxu0 %v1129
        %1179 = vmatpush.msra.mxu0 %v1128
        %1180 = vmatmul.f32.gmra.mxu0 %v466
        %v1181 = vpop.f32.mrf.mxu0
        %v1182 = vadd.f32 %v1162, %v1181
        %1183 = vmatmul.f32.gmra.mxu0 %v467
        %v1184 = vpop.f32.mrf.mxu0
        %v1185 = vadd.f32 %v1162, %v1184
        %1186 = vmatmul.f32.gmra.mxu0 %v468
        %v1187 = vpop.f32.mrf.mxu0
        %v1188 = vadd.f32 %v1162, %v1187
        %1189 = vmatmul.f32.gmra.mxu0 %v469
        %v1190 = vpop.f32.mrf.mxu0
        %v1191 = vadd.f32 %v1162, %v1190
        %1192 = vmatmul.f32.gmra.mxu0 %v470
        %v1193 = vpop.f32.mrf.mxu0
        %v1194 = vadd.f32 %v1162, %v1193
        %1195 = vmatmul.f32.gmra.mxu0 %v471
        %v1196 = vpop.f32.mrf.mxu0
        %v1197 = vadd.f32 %v1162, %v1196
        %1198 = vmatmul.f32.gmra.mxu0 %v472
        %v1199 = vpop.f32.mrf.mxu0
        %v1200 = vadd.f32 %v1162, %v1199
        %1201 = vmatmul.f32.gmra.mxu0 %v473
        %v1202 = vpop.f32.mrf.mxu0
        %v1203 = vadd.f32 %v1162, %v1202
        %1204 = vmatmul.f32.gmra.mxu0 %v474
        %v1205 = vpop.f32.mrf.mxu0
        %v1206 = vadd.f32 %v1162, %v1205
        %1207 = vmatmul.f32.gmra.mxu0 %v475
        %v1208 = vpop.f32.mrf.mxu0
        %v1209 = vadd.f32 %v1162, %v1208
        %1210 = vmatmul.f32.gmra.mxu0 %v476
        %v1211 = vpop.f32.mrf.mxu0
        %v1212 = vadd.f32 %v1162, %v1211
        %1213 = vmatmul.f32.gmra.mxu0 %v477
        %v1214 = vpop.f32.mrf.mxu0
        %v1215 = vadd.f32 %v1162, %v1214
        %1216 = vmatmul.f32.gmra.mxu0 %v478
        %v1217 = vpop.f32.mrf.mxu0
        %v1218 = vadd.f32 %v1162, %v1217
        %1219 = vmatmul.f32.gmra.mxu0 %v479
        %v1220 = vpop.f32.mrf.mxu0
        %v1221 = vadd.f32 %v1162, %v1220
        %1222 = vmatmul.f32.gmra.mxu0 %v480
        %v1223 = vpop.f32.mrf.mxu0
        %v1224 = vadd.f32 %v1162, %v1223
        %1225 = vmatmul.f32.gmra.mxu0 %v481
        %v1226 = vpop.f32.mrf.mxu0
        %v1227 = vadd.f32 %v1162, %v1226
        %1228 = vdwg.mxu0
        %1229 = vmatpush.msra.mxu0 %v1159
        %1230 = vmatpush.msra.mxu0 %v1158
        %1231 = vmatpush.msra.mxu0 %v1157
        %1232 = vmatpush.msra.mxu0 %v1156
        %1233 = vmatpush.msra.mxu0 %v1155
        %1234 = vmatpush.msra.mxu0 %v1154
        %1235 = vmatpush.msra.mxu0 %v1153
        %1236 = vmatpush.msra.mxu0 %v1152
        %1237 = vmatpush.msra.mxu0 %v1151
        %1238 = vmatpush.msra.mxu0 %v1150
        %1239 = vmatpush.msra.mxu0 %v1149
        %1240 = vmatpush.msra.mxu0 %v1148
        %1241 = vmatpush.msra.mxu0 %v1147
        %1242 = vmatpush.msra.mxu0 %v1146
        %1243 = vmatpush.msra.mxu0 %v1145
        %1244 = vmatpush.msra.mxu0 %v1144
        %1245 = vmatmul.f32.gmra.mxu0 %v1016
        %v1246 = vpop.f32.mrf.mxu0
        %v1247 = vadd.f32 %v1182, %v1246
        %1248 = vmatmul.f32.gmra.mxu0 %v1017
        %v1249 = vpop.f32.mrf.mxu0
        %v1250 = vadd.f32 %v1185, %v1249
        %1251 = vmatmul.f32.gmra.mxu0 %v1018
        %v1252 = vpop.f32.mrf.mxu0
        %v1253 = vadd.f32 %v1188, %v1252
        %1254 = vmatmul.f32.gmra.mxu0 %v1019
        %v1255 = vpop.f32.mrf.mxu0
        %v1256 = vadd.f32 %v1191, %v1255
        %1257 = vmatmul.f32.gmra.mxu0 %v1020
        %v1258 = vpop.f32.mrf.mxu0
        %v1259 = vadd.f32 %v1194, %v1258
        %1260 = vmatmul.f32.gmra.mxu0 %v1021
        %v1261 = vpop.f32.mrf.mxu0
        %v1262 = vadd.f32 %v1197, %v1261
        %1263 = vmatmul.f32.gmra.mxu0 %v1022
        %v1264 = vpop.f32.mrf.mxu0
        %v1265 = vadd.f32 %v1200, %v1264
        %1266 = vmatmul.f32.gmra.mxu0 %v1023
        %v1267 = vpop.f32.mrf.mxu0
        %v1268 = vadd.f32 %v1203, %v1267
        %1269 = vmatmul.f32.gmra.mxu0 %v1024
        %v1270 = vpop.f32.mrf.mxu0
        %v1271 = vadd.f32 %v1206, %v1270
        %1272 = vmatmul.f32.gmra.mxu0 %v1025
        %v1273 = vpop.f32.mrf.mxu0
        %v1274 = vadd.f32 %v1209, %v1273
        %1275 = vmatmul.f32.gmra.mxu0 %v1026
        %v1276 = vpop.f32.mrf.mxu0
        %v1277 = vadd.f32 %v1212, %v1276
        %1278 = vmatmul.f32.gmra.mxu0 %v1027
        %v1279 = vpop.f32.mrf.mxu0
        %v1280 = vadd.f32 %v1215, %v1279
        %1281 = vmatmul.f32.gmra.mxu0 %v1028
        %v1282 = vpop.f32.mrf.mxu0
        %v1283 = vadd.f32 %v1218, %v1282
        %1284 = vmatmul.f32.gmra.mxu0 %v1029
        %v1285 = vpop.f32.mrf.mxu0
        %v1286 = vadd.f32 %v1221, %v1285
        %1287 = vmatmul.f32.gmra.mxu0 %v1030
        %v1288 = vpop.f32.mrf.mxu0
        %v1289 = vadd.f32 %v1224, %v1288
        %1290 = vmatmul.f32.gmra.mxu0 %v1031
        %v1291 = vpop.f32.mrf.mxu0
        %v1292 = vadd.f32 %v1227, %v1291
        %1293 = vdwg.mxu0
        %v1294 = vxor.u32 %v1247, 2147483648
        %v1295 = vxor.u32 %v1250, 2147483648
        %v1296 = vxor.u32 %v1253, 2147483648
        %v1297 = vxor.u32 %v1256, 2147483648
        %v1298 = vxor.u32 %v1259, 2147483648
        %v1299 = vxor.u32 %v1262, 2147483648
        %v1300 = vxor.u32 %v1265, 2147483648
        %v1301 = vxor.u32 %v1268, 2147483648
        %v1302 = vxor.u32 %v1271, 2147483648
        %v1303 = vxor.u32 %v1274, 2147483648
        %v1304 = vxor.u32 %v1277, 2147483648
        %v1305 = vxor.u32 %v1280, 2147483648
        %v1306 = vxor.u32 %v1283, 2147483648
        %v1307 = vxor.u32 %v1286, 2147483648
        %v1308 = vxor.u32 %v1289, 2147483648
        %v1309 = vxor.u32 %v1292, 2147483648
        %v1310 = vmul.f32 %v1294, 1.442695
        %v1311 = vpow.pop %v1310
        %v1312 = vmul.f32 %v1295, 1.442695
        %v1313 = vpow.pop %v1312
        %v1314 = vmul.f32 %v1296, 1.442695
        %v1315 = vpow.pop %v1314
        %v1316 = vmul.f32 %v1297, 1.442695
        %v1317 = vpow.pop %v1316
        %v1318 = vmul.f32 %v1298, 1.442695
        %v1319 = vpow.pop %v1318
        %v1320 = vmul.f32 %v1299, 1.442695
        %v1321 = vpow.pop %v1320
        %v1322 = vmul.f32 %v1300, 1.442695
        %v1323 = vpow.pop %v1322
        %v1324 = vmul.f32 %v1301, 1.442695
        %v1325 = vpow.pop %v1324
        %v1326 = vmul.f32 %v1302, 1.442695
        %v1327 = vpow.pop %v1326
        %v1328 = vmul.f32 %v1303, 1.442695
        %v1329 = vpow.pop %v1328
        %v1330 = vmul.f32 %v1304, 1.442695
        %v1331 = vpow.pop %v1330
        %v1332 = vmul.f32 %v1305, 1.442695
        %v1333 = vpow.pop %v1332
        %v1334 = vmul.f32 %v1306, 1.442695
        %v1335 = vpow.pop %v1334
        %v1336 = vmul.f32 %v1307, 1.442695
        %v1337 = vpow.pop %v1336
        %v1338 = vmul.f32 %v1308, 1.442695
        %v1339 = vpow.pop %v1338
        %v1340 = vmul.f32 %v1309, 1.442695
        %v1341 = vpow.pop %v1340
        %v1342 = vadd.f32 %v1311, 1.0
        %v1343 = vadd.f32 %v1313, 1.0
        %v1344 = vadd.f32 %v1315, 1.0
        %v1345 = vadd.f32 %v1317, 1.0
        %v1346 = vadd.f32 %v1319, 1.0
        %v1347 = vadd.f32 %v1321, 1.0
        %v1348 = vadd.f32 %v1323, 1.0
        %v1349 = vadd.f32 %v1325, 1.0
        %v1350 = vadd.f32 %v1327, 1.0
        %v1351 = vadd.f32 %v1329, 1.0
        %v1352 = vadd.f32 %v1331, 1.0
        %v1353 = vadd.f32 %v1333, 1.0
        %v1354 = vadd.f32 %v1335, 1.0
        %v1355 = vadd.f32 %v1337, 1.0
        %v1356 = vadd.f32 %v1339, 1.0
        %v1357 = vadd.f32 %v1341, 1.0
        %v1358 = vrcp.pop %v1342
        %v1359 = vmul.f32 %v1342, %v1358
        %v1360 = vsub.f32 1.0, %v1359
        %v1361 = vmul.f32 %v1358, %v1360
        %v1362 = vadd.f32 %v1358, %v1361
        %vm1363 = vweird.f32 %v1342
        %vm1364 = vweird.f32 %v1358
        %vm1365 = vmor %vm1363, %vm1364
        %v1366 = vsel %vm1365, %v1358, %v1362
        %v1367 = vand.u32 2147483647, %v1342
        %vm1368 = vcmp.eq.f32.partialorder %v1367, 8.507059e+37
        %v1369 = vand.u32 %v1342, 2147483648
        %v1370 = vor.u32 1.1754944e-38, %v1369
        %v1371 = vsel %vm1368, %v1370, %v1366
        %v1372 = vmul.f32 1.0, %v1371
        %v1373 = vrcp.pop %v1343
        %v1374 = vmul.f32 %v1343, %v1373
        %v1375 = vsub.f32 1.0, %v1374
        %v1376 = vmul.f32 %v1373, %v1375
        %v1377 = vadd.f32 %v1373, %v1376
        %vm1378 = vweird.f32 %v1343
        %vm1379 = vweird.f32 %v1373
        %vm1380 = vmor %vm1378, %vm1379
        %v1381 = vsel %vm1380, %v1373, %v1377
        %v1382 = vand.u32 2147483647, %v1343
        %vm1383 = vcmp.eq.f32.partialorder %v1382, 8.507059e+37
        %v1384 = vand.u32 %v1343, 2147483648
        %v1385 = vor.u32 1.1754944e-38, %v1384
        %v1386 = vsel %vm1383, %v1385, %v1381
        %v1387 = vmul.f32 1.0, %v1386
        %v1388 = vrcp.pop %v1344
        %v1389 = vmul.f32 %v1344, %v1388
        %v1390 = vsub.f32 1.0, %v1389
        %v1391 = vmul.f32 %v1388, %v1390
        %v1392 = vadd.f32 %v1388, %v1391
        %vm1393 = vweird.f32 %v1344
        %vm1394 = vweird.f32 %v1388
        %vm1395 = vmor %vm1393, %vm1394
        %v1396 = vsel %vm1395, %v1388, %v1392
        %v1397 = vand.u32 2147483647, %v1344
        %vm1398 = vcmp.eq.f32.partialorder %v1397, 8.507059e+37
        %v1399 = vand.u32 %v1344, 2147483648
        %v1400 = vor.u32 1.1754944e-38, %v1399
        %v1401 = vsel %vm1398, %v1400, %v1396
        %v1402 = vmul.f32 1.0, %v1401
        %v1403 = vrcp.pop %v1345
        %v1404 = vmul.f32 %v1345, %v1403
        %v1405 = vsub.f32 1.0, %v1404
        %v1406 = vmul.f32 %v1403, %v1405
        %v1407 = vadd.f32 %v1403, %v1406
        %vm1408 = vweird.f32 %v1345
        %vm1409 = vweird.f32 %v1403
        %vm1410 = vmor %vm1408, %vm1409
        %v1411 = vsel %vm1410, %v1403, %v1407
        %v1412 = vand.u32 2147483647, %v1345
        %vm1413 = vcmp.eq.f32.partialorder %v1412, 8.507059e+37
        %v1414 = vand.u32 %v1345, 2147483648
        %v1415 = vor.u32 1.1754944e-38, %v1414
        %v1416 = vsel %vm1413, %v1415, %v1411
        %v1417 = vmul.f32 1.0, %v1416
        %v1418 = vrcp.pop %v1346
        %v1419 = vmul.f32 %v1346, %v1418
        %v1420 = vsub.f32 1.0, %v1419
        %v1421 = vmul.f32 %v1418, %v1420
        %v1422 = vadd.f32 %v1418, %v1421
        %vm1423 = vweird.f32 %v1346
        %vm1424 = vweird.f32 %v1418
        %vm1425 = vmor %vm1423, %vm1424
        %v1426 = vsel %vm1425, %v1418, %v1422
        %v1427 = vand.u32 2147483647, %v1346
        %vm1428 = vcmp.eq.f32.partialorder %v1427, 8.507059e+37
        %v1429 = vand.u32 %v1346, 2147483648
        %v1430 = vor.u32 1.1754944e-38, %v1429
        %v1431 = vsel %vm1428, %v1430, %v1426
        %v1432 = vmul.f32 1.0, %v1431
        %v1433 = vrcp.pop %v1347
        %v1434 = vmul.f32 %v1347, %v1433
        %v1435 = vsub.f32 1.0, %v1434
        %v1436 = vmul.f32 %v1433, %v1435
        %v1437 = vadd.f32 %v1433, %v1436
        %vm1438 = vweird.f32 %v1347
        %vm1439 = vweird.f32 %v1433
        %vm1440 = vmor %vm1438, %vm1439
        %v1441 = vsel %vm1440, %v1433, %v1437
        %v1442 = vand.u32 2147483647, %v1347
        %vm1443 = vcmp.eq.f32.partialorder %v1442, 8.507059e+37
        %v1444 = vand.u32 %v1347, 2147483648
        %v1445 = vor.u32 1.1754944e-38, %v1444
        %v1446 = vsel %vm1443, %v1445, %v1441
        %v1447 = vmul.f32 1.0, %v1446
        %v1448 = vrcp.pop %v1348
        %v1449 = vmul.f32 %v1348, %v1448
        %v1450 = vsub.f32 1.0, %v1449
        %v1451 = vmul.f32 %v1448, %v1450
        %v1452 = vadd.f32 %v1448, %v1451
        %vm1453 = vweird.f32 %v1348
        %vm1454 = vweird.f32 %v1448
        %vm1455 = vmor %vm1453, %vm1454
        %v1456 = vsel %vm1455, %v1448, %v1452
        %v1457 = vand.u32 2147483647, %v1348
        %vm1458 = vcmp.eq.f32.partialorder %v1457, 8.507059e+37
        %v1459 = vand.u32 %v1348, 2147483648
        %v1460 = vor.u32 1.1754944e-38, %v1459
        %v1461 = vsel %vm1458, %v1460, %v1456
        %v1462 = vmul.f32 1.0, %v1461
        %v1463 = vrcp.pop %v1349
        %v1464 = vmul.f32 %v1349, %v1463
        %v1465 = vsub.f32 1.0, %v1464
        %v1466 = vmul.f32 %v1463, %v1465
        %v1467 = vadd.f32 %v1463, %v1466
        %vm1468 = vweird.f32 %v1349
        %vm1469 = vweird.f32 %v1463
        %vm1470 = vmor %vm1468, %vm1469
        %v1471 = vsel %vm1470, %v1463, %v1467
        %v1472 = vand.u32 2147483647, %v1349
        %vm1473 = vcmp.eq.f32.partialorder %v1472, 8.507059e+37
        %v1474 = vand.u32 %v1349, 2147483648
        %v1475 = vor.u32 1.1754944e-38, %v1474
        %v1476 = vsel %vm1473, %v1475, %v1471
        %v1477 = vmul.f32 1.0, %v1476
        %v1478 = vrcp.pop %v1350
        %v1479 = vmul.f32 %v1350, %v1478
        %v1480 = vsub.f32 1.0, %v1479
        %v1481 = vmul.f32 %v1478, %v1480
        %v1482 = vadd.f32 %v1478, %v1481
        %vm1483 = vweird.f32 %v1350
        %vm1484 = vweird.f32 %v1478
        %vm1485 = vmor %vm1483, %vm1484
        %v1486 = vsel %vm1485, %v1478, %v1482
        %v1487 = vand.u32 2147483647, %v1350
        %vm1488 = vcmp.eq.f32.partialorder %v1487, 8.507059e+37
        %v1489 = vand.u32 %v1350, 2147483648
        %v1490 = vor.u32 1.1754944e-38, %v1489
        %v1491 = vsel %vm1488, %v1490, %v1486
        %v1492 = vmul.f32 1.0, %v1491
        %v1493 = vrcp.pop %v1351
        %v1494 = vmul.f32 %v1351, %v1493
        %v1495 = vsub.f32 1.0, %v1494
        %v1496 = vmul.f32 %v1493, %v1495
        %v1497 = vadd.f32 %v1493, %v1496
        %vm1498 = vweird.f32 %v1351
        %vm1499 = vweird.f32 %v1493
        %vm1500 = vmor %vm1498, %vm1499
        %v1501 = vsel %vm1500, %v1493, %v1497
        %v1502 = vand.u32 2147483647, %v1351
        %vm1503 = vcmp.eq.f32.partialorder %v1502, 8.507059e+37
        %v1504 = vand.u32 %v1351, 2147483648
        %v1505 = vor.u32 1.1754944e-38, %v1504
        %v1506 = vsel %vm1503, %v1505, %v1501
        %v1507 = vmul.f32 1.0, %v1506
        %v1508 = vrcp.pop %v1352
        %v1509 = vmul.f32 %v1352, %v1508
        %v1510 = vsub.f32 1.0, %v1509
        %v1511 = vmul.f32 %v1508, %v1510
        %v1512 = vadd.f32 %v1508, %v1511
        %vm1513 = vweird.f32 %v1352
        %vm1514 = vweird.f32 %v1508
        %vm1515 = vmor %vm1513, %vm1514
        %v1516 = vsel %vm1515, %v1508, %v1512
        %v1517 = vand.u32 2147483647, %v1352
        %vm1518 = vcmp.eq.f32.partialorder %v1517, 8.507059e+37
        %v1519 = vand.u32 %v1352, 2147483648
        %v1520 = vor.u32 1.1754944e-38, %v1519
        %v1521 = vsel %vm1518, %v1520, %v1516
        %v1522 = vmul.f32 1.0, %v1521
        %v1523 = vrcp.pop %v1353
        %v1524 = vmul.f32 %v1353, %v1523
        %v1525 = vsub.f32 1.0, %v1524
        %v1526 = vmul.f32 %v1523, %v1525
        %v1527 = vadd.f32 %v1523, %v1526
        %vm1528 = vweird.f32 %v1353
        %vm1529 = vweird.f32 %v1523
        %vm1530 = vmor %vm1528, %vm1529
        %v1531 = vsel %vm1530, %v1523, %v1527
        %v1532 = vand.u32 2147483647, %v1353
        %vm1533 = vcmp.eq.f32.partialorder %v1532, 8.507059e+37
        %v1534 = vand.u32 %v1353, 2147483648
        %v1535 = vor.u32 1.1754944e-38, %v1534
        %v1536 = vsel %vm1533, %v1535, %v1531
        %v1537 = vmul.f32 1.0, %v1536
        %v1538 = vrcp.pop %v1354
        %v1539 = vmul.f32 %v1354, %v1538
        %v1540 = vsub.f32 1.0, %v1539
        %v1541 = vmul.f32 %v1538, %v1540
        %v1542 = vadd.f32 %v1538, %v1541
        %vm1543 = vweird.f32 %v1354
        %vm1544 = vweird.f32 %v1538
        %vm1545 = vmor %vm1543, %vm1544
        %v1546 = vsel %vm1545, %v1538, %v1542
        %v1547 = vand.u32 2147483647, %v1354
        %vm1548 = vcmp.eq.f32.partialorder %v1547, 8.507059e+37
        %v1549 = vand.u32 %v1354, 2147483648
        %v1550 = vor.u32 1.1754944e-38, %v1549
        %v1551 = vsel %vm1548, %v1550, %v1546
        %v1552 = vmul.f32 1.0, %v1551
        %v1553 = vrcp.pop %v1355
        %v1554 = vmul.f32 %v1355, %v1553
        %v1555 = vsub.f32 1.0, %v1554
        %v1556 = vmul.f32 %v1553, %v1555
        %v1557 = vadd.f32 %v1553, %v1556
        %vm1558 = vweird.f32 %v1355
        %vm1559 = vweird.f32 %v1553
        %vm1560 = vmor %vm1558, %vm1559
        %v1561 = vsel %vm1560, %v1553, %v1557
        %v1562 = vand.u32 2147483647, %v1355
        %vm1563 = vcmp.eq.f32.partialorder %v1562, 8.507059e+37
        %v1564 = vand.u32 %v1355, 2147483648
        %v1565 = vor.u32 1.1754944e-38, %v1564
        %v1566 = vsel %vm1563, %v1565, %v1561
        %v1567 = vmul.f32 1.0, %v1566
        %v1568 = vrcp.pop %v1356
        %v1569 = vmul.f32 %v1356, %v1568
        %v1570 = vsub.f32 1.0, %v1569
        %v1571 = vmul.f32 %v1568, %v1570
        %v1572 = vadd.f32 %v1568, %v1571
        %vm1573 = vweird.f32 %v1356
        %vm1574 = vweird.f32 %v1568
        %vm1575 = vmor %vm1573, %vm1574
        %v1576 = vsel %vm1575, %v1568, %v1572
        %v1577 = vand.u32 2147483647, %v1356
        %vm1578 = vcmp.eq.f32.partialorder %v1577, 8.507059e+37
        %v1579 = vand.u32 %v1356, 2147483648
        %v1580 = vor.u32 1.1754944e-38, %v1579
        %v1581 = vsel %vm1578, %v1580, %v1576
        %v1582 = vmul.f32 1.0, %v1581
        %v1583 = vrcp.pop %v1357
        %v1584 = vmul.f32 %v1357, %v1583
        %v1585 = vsub.f32 1.0, %v1584
        %v1586 = vmul.f32 %v1583, %v1585
        %v1587 = vadd.f32 %v1583, %v1586
        %vm1588 = vweird.f32 %v1357
        %vm1589 = vweird.f32 %v1583
        %vm1590 = vmor %vm1588, %vm1589
        %v1591 = vsel %vm1590, %v1583, %v1587
        %v1592 = vand.u32 2147483647, %v1357
        %vm1593 = vcmp.eq.f32.partialorder %v1592, 8.507059e+37
        %v1594 = vand.u32 %v1357, 2147483648
        %v1595 = vor.u32 1.1754944e-38, %v1594
        %v1596 = vsel %vm1593, %v1595, %v1591
        %v1597 = vmul.f32 1.0, %v1596
        %v1598 = vmul.f32 %v1247, %v1372
        %v1599 = vmul.f32 %v1250, %v1387
        %v1600 = vmul.f32 %v1253, %v1402
        %v1601 = vmul.f32 %v1256, %v1417
        %v1602 = vmul.f32 %v1259, %v1432
        %v1603 = vmul.f32 %v1262, %v1447
        %v1604 = vmul.f32 %v1265, %v1462
        %v1605 = vmul.f32 %v1268, %v1477
        %v1606 = vmul.f32 %v1271, %v1492
        %v1607 = vmul.f32 %v1274, %v1507
        %v1608 = vmul.f32 %v1277, %v1522
        %v1609 = vmul.f32 %v1280, %v1537
        %v1610 = vmul.f32 %v1283, %v1552
        %v1611 = vmul.f32 %v1286, %v1567
        %v1612 = vmul.f32 %v1289, %v1582
        %v1613 = vmul.f32 %v1292, %v1597
        %v1614 = vld [vmem:[#allocation10] sm:$0xff]
        %v1615 = vld [vmem:[#allocation10 + $0x8] sm:$0xff]
        %v1616 = vld [vmem:[#allocation10 + $0x10] sm:$0xff]
        %v1617 = vld [vmem:[#allocation10 + $0x18] sm:$0xff]
        %v1618 = vld [vmem:[#allocation10 + $0x20] sm:$0xff]
        %v1619 = vld [vmem:[#allocation10 + $0x28] sm:$0xff]
        %v1620 = vld [vmem:[#allocation10 + $0x30] sm:$0xff]
        %v1621 = vld [vmem:[#allocation10 + $0x38] sm:$0xff]
        %v1622 = vld [vmem:[#allocation10 + $0x40] sm:$0xff]
        %v1623 = vld [vmem:[#allocation10 + $0x48] sm:$0xff]
        %v1624 = vld [vmem:[#allocation10 + $0x50] sm:$0xff]
        %v1625 = vld [vmem:[#allocation10 + $0x58] sm:$0xff]
        %v1626 = vld [vmem:[#allocation10 + $0x60] sm:$0xff]
        %v1627 = vld [vmem:[#allocation10 + $0x68] sm:$0xff]
        %v1628 = vld [vmem:[#allocation10 + $0x70] sm:$0xff]
        %v1629 = vld [vmem:[#allocation10 + $0x78] sm:$0xff]
        %v1630 = vld [vmem:[#allocation10 + $0x80] sm:$0xff]
        %v1631 = vld [vmem:[#allocation10 + $0x88] sm:$0xff]
        %v1632 = vld [vmem:[#allocation10 + $0x90] sm:$0xff]
        %v1633 = vld [vmem:[#allocation10 + $0x98] sm:$0xff]
        %v1634 = vld [vmem:[#allocation10 + $0xa0] sm:$0xff]
        %v1635 = vld [vmem:[#allocation10 + $0xa8] sm:$0xff]
        %v1636 = vld [vmem:[#allocation10 + $0xb0] sm:$0xff]
        %v1637 = vld [vmem:[#allocation10 + $0xb8] sm:$0xff]
        %v1638 = vld [vmem:[#allocation10 + $0xc0] sm:$0xff]
        %v1639 = vld [vmem:[#allocation10 + $0xc8] sm:$0xff]
        %v1640 = vld [vmem:[#allocation10 + $0xd0] sm:$0xff]
        %v1641 = vld [vmem:[#allocation10 + $0xd8] sm:$0xff]
        %v1642 = vld [vmem:[#allocation10 + $0xe0] sm:$0xff]
        %v1643 = vld [vmem:[#allocation10 + $0xe8] sm:$0xff]
        %v1644 = vld [vmem:[#allocation10 + $0xf0] sm:$0xff]
        %v1645 = vld [vmem:[#allocation10 + $0xf8] sm:$0xff]
        %v1646 = vld [vmem:[#allocation10 + $0x100] sm:$0xff]
        %v1647 = vld [vmem:[#allocation10 + $0x108] sm:$0xff]
        %v1648 = vld [vmem:[#allocation10 + $0x110] sm:$0xff]
        %v1649 = vld [vmem:[#allocation10 + $0x118] sm:$0xff]
        %v1650 = vld [vmem:[#allocation10 + $0x120] sm:$0xff]
        %v1651 = vld [vmem:[#allocation10 + $0x128] sm:$0xff]
        %v1652 = vld [vmem:[#allocation10 + $0x130] sm:$0xff]
        %v1653 = vld [vmem:[#allocation10 + $0x138] sm:$0xff]
        %v1654 = vld [vmem:[#allocation10 + $0x140] sm:$0xff]
        %v1655 = vld [vmem:[#allocation10 + $0x148] sm:$0xff]
        %v1656 = vld [vmem:[#allocation10 + $0x150] sm:$0xff]
        %v1657 = vld [vmem:[#allocation10 + $0x158] sm:$0xff]
        %v1658 = vld [vmem:[#allocation10 + $0x160] sm:$0xff]
        %v1659 = vld [vmem:[#allocation10 + $0x168] sm:$0xff]
        %v1660 = vld [vmem:[#allocation10 + $0x170] sm:$0xff]
        %v1661 = vld [vmem:[#allocation10 + $0x178] sm:$0xff]
        %v1662 = vld [vmem:[%s6] sm:$0x7]
        %v1664 = vperm.slane %v1662, 0
        %v1665 = vperm.slane %v1662, 1
        %v1666 = vperm.slane %v1662, 2
        %1670 = vmatpush.msra.mxu0 %v1659
        %1671 = vmatpush.msra.mxu0 %v1656
        %1672 = vmatpush.msra.mxu0 %v1653
        %1673 = vmatpush.msra.mxu0 %v1650
        %1674 = vmatpush.msra.mxu0 %v1647
        %1675 = vmatpush.msra.mxu0 %v1644
        %1676 = vmatpush.msra.mxu0 %v1641
        %1677 = vmatpush.msra.mxu0 %v1638
        %1678 = vmatpush.msra.mxu0 %v1635
        %1679 = vmatpush.msra.mxu0 %v1632
        %1680 = vmatpush.msra.mxu0 %v1629
        %1681 = vmatpush.msra.mxu0 %v1626
        %1682 = vmatpush.msra.mxu0 %v1623
        %1683 = vmatpush.msra.mxu0 %v1620
        %1684 = vmatpush.msra.mxu0 %v1617
        %1685 = vmatpush.msra.mxu0 %v1614
        %1686 = vmatmul.f32.gmra.mxu0 %v1598
        %v1687 = vpop.f32.mrf.mxu0
        %v1688 = vadd.f32 %v1664, %v1687
        %1689 = vmatmul.f32.gmra.mxu0 %v1599
        %v1690 = vpop.f32.mrf.mxu0
        %v1691 = vadd.f32 %v1664, %v1690
        %1692 = vmatmul.f32.gmra.mxu0 %v1600
        %v1693 = vpop.f32.mrf.mxu0
        %v1694 = vadd.f32 %v1664, %v1693
        %1695 = vmatmul.f32.gmra.mxu0 %v1601
        %v1696 = vpop.f32.mrf.mxu0
        %v1697 = vadd.f32 %v1664, %v1696
        %1698 = vmatmul.f32.gmra.mxu0 %v1602
        %v1699 = vpop.f32.mrf.mxu0
        %v1700 = vadd.f32 %v1664, %v1699
        %1701 = vmatmul.f32.gmra.mxu0 %v1603
        %v1702 = vpop.f32.mrf.mxu0
        %v1703 = vadd.f32 %v1664, %v1702
        %1704 = vmatmul.f32.gmra.mxu0 %v1604
        %v1705 = vpop.f32.mrf.mxu0
        %v1706 = vadd.f32 %v1664, %v1705
        %1707 = vmatmul.f32.gmra.mxu0 %v1605
        %v1708 = vpop.f32.mrf.mxu0
        %v1709 = vadd.f32 %v1664, %v1708
        %1710 = vmatmul.f32.gmra.mxu0 %v1606
        %v1711 = vpop.f32.mrf.mxu0
        %v1712 = vadd.f32 %v1664, %v1711
        %1713 = vmatmul.f32.gmra.mxu0 %v1607
        %v1714 = vpop.f32.mrf.mxu0
        %v1715 = vadd.f32 %v1664, %v1714
        %1716 = vmatmul.f32.gmra.mxu0 %v1608
        %v1717 = vpop.f32.mrf.mxu0
        %v1718 = vadd.f32 %v1664, %v1717
        %1719 = vmatmul.f32.gmra.mxu0 %v1609
        %v1720 = vpop.f32.mrf.mxu0
        %v1721 = vadd.f32 %v1664, %v1720
        %1722 = vmatmul.f32.gmra.mxu0 %v1610
        %v1723 = vpop.f32.mrf.mxu0
        %v1724 = vadd.f32 %v1664, %v1723
        %1725 = vmatmul.f32.gmra.mxu0 %v1611
        %v1726 = vpop.f32.mrf.mxu0
        %v1727 = vadd.f32 %v1664, %v1726
        %1728 = vmatmul.f32.gmra.mxu0 %v1612
        %v1729 = vpop.f32.mrf.mxu0
        %v1730 = vadd.f32 %v1664, %v1729
        %1731 = vmatmul.f32.gmra.mxu0 %v1613
        %v1732 = vpop.f32.mrf.mxu0
        %v1733 = vadd.f32 %v1664, %v1732
        %1734 = vdwg.mxu0
        %1735 = vmatpush.msra.mxu0 %v1660
        %1736 = vmatpush.msra.mxu0 %v1657
        %1737 = vmatpush.msra.mxu0 %v1654
        %1738 = vmatpush.msra.mxu0 %v1651
        %1739 = vmatpush.msra.mxu0 %v1648
        %1740 = vmatpush.msra.mxu0 %v1645
        %1741 = vmatpush.msra.mxu0 %v1642
        %1742 = vmatpush.msra.mxu0 %v1639
        %1743 = vmatpush.msra.mxu0 %v1636
        %1744 = vmatpush.msra.mxu0 %v1633
        %1745 = vmatpush.msra.mxu0 %v1630
        %1746 = vmatpush.msra.mxu0 %v1627
        %1747 = vmatpush.msra.mxu0 %v1624
        %1748 = vmatpush.msra.mxu0 %v1621
        %1749 = vmatpush.msra.mxu0 %v1618
        %1750 = vmatpush.msra.mxu0 %v1615
        %1751 = vmatmul.f32.gmra.mxu0 %v1598
        %v1752 = vpop.f32.mrf.mxu0
        %v1753 = vadd.f32 %v1665, %v1752
        %1754 = vmatmul.f32.gmra.mxu0 %v1599
        %v1755 = vpop.f32.mrf.mxu0
        %v1756 = vadd.f32 %v1665, %v1755
        %1757 = vmatmul.f32.gmra.mxu0 %v1600
        %v1758 = vpop.f32.mrf.mxu0
        %v1759 = vadd.f32 %v1665, %v1758
        %1760 = vmatmul.f32.gmra.mxu0 %v1601
        %v1761 = vpop.f32.mrf.mxu0
        %v1762 = vadd.f32 %v1665, %v1761
        %1763 = vmatmul.f32.gmra.mxu0 %v1602
        %v1764 = vpop.f32.mrf.mxu0
        %v1765 = vadd.f32 %v1665, %v1764
        %1766 = vmatmul.f32.gmra.mxu0 %v1603
        %v1767 = vpop.f32.mrf.mxu0
        %v1768 = vadd.f32 %v1665, %v1767
        %1769 = vmatmul.f32.gmra.mxu0 %v1604
        %v1770 = vpop.f32.mrf.mxu0
        %v1771 = vadd.f32 %v1665, %v1770
        %1772 = vmatmul.f32.gmra.mxu0 %v1605
        %v1773 = vpop.f32.mrf.mxu0
        %v1774 = vadd.f32 %v1665, %v1773
        %1775 = vmatmul.f32.gmra.mxu0 %v1606
        %v1776 = vpop.f32.mrf.mxu0
        %v1777 = vadd.f32 %v1665, %v1776
        %1778 = vmatmul.f32.gmra.mxu0 %v1607
        %v1779 = vpop.f32.mrf.mxu0
        %v1780 = vadd.f32 %v1665, %v1779
        %1781 = vmatmul.f32.gmra.mxu0 %v1608
        %v1782 = vpop.f32.mrf.mxu0
        %v1783 = vadd.f32 %v1665, %v1782
        %1784 = vmatmul.f32.gmra.mxu0 %v1609
        %v1785 = vpop.f32.mrf.mxu0
        %v1786 = vadd.f32 %v1665, %v1785
        %1787 = vmatmul.f32.gmra.mxu0 %v1610
        %v1788 = vpop.f32.mrf.mxu0
        %v1789 = vadd.f32 %v1665, %v1788
        %1790 = vmatmul.f32.gmra.mxu0 %v1611
        %v1791 = vpop.f32.mrf.mxu0
        %v1792 = vadd.f32 %v1665, %v1791
        %1793 = vmatmul.f32.gmra.mxu0 %v1612
        %v1794 = vpop.f32.mrf.mxu0
        %v1795 = vadd.f32 %v1665, %v1794
        %1796 = vmatmul.f32.gmra.mxu0 %v1613
        %v1797 = vpop.f32.mrf.mxu0
        %v1798 = vadd.f32 %v1665, %v1797
        %1799 = vdwg.mxu0
        %1800 = vmatpush.msra.mxu0 %v1661
        %1801 = vmatpush.msra.mxu0 %v1658
        %1802 = vmatpush.msra.mxu0 %v1655
        %1803 = vmatpush.msra.mxu0 %v1652
        %1804 = vmatpush.msra.mxu0 %v1649
        %1805 = vmatpush.msra.mxu0 %v1646
        %1806 = vmatpush.msra.mxu0 %v1643
        %1807 = vmatpush.msra.mxu0 %v1640
        %1808 = vmatpush.msra.mxu0 %v1637
        %1809 = vmatpush.msra.mxu0 %v1634
        %1810 = vmatpush.msra.mxu0 %v1631
        %1811 = vmatpush.msra.mxu0 %v1628
        %1812 = vmatpush.msra.mxu0 %v1625
        %1813 = vmatpush.msra.mxu0 %v1622
        %1814 = vmatpush.msra.mxu0 %v1619
        %1815 = vmatpush.msra.mxu0 %v1616
        %1816 = vmatmul.f32.gmra.mxu0 %v1598
        %v1817 = vpop.f32.mrf.mxu0
        %v1818 = vadd.f32 %v1666, %v1817
        %1819 = vmatmul.f32.gmra.mxu0 %v1599
        %v1820 = vpop.f32.mrf.mxu0
        %v1821 = vadd.f32 %v1666, %v1820
        %1822 = vmatmul.f32.gmra.mxu0 %v1600
        %v1823 = vpop.f32.mrf.mxu0
        %v1824 = vadd.f32 %v1666, %v1823
        %1825 = vmatmul.f32.gmra.mxu0 %v1601
        %v1826 = vpop.f32.mrf.mxu0
        %v1827 = vadd.f32 %v1666, %v1826
        %1828 = vmatmul.f32.gmra.mxu0 %v1602
        %v1829 = vpop.f32.mrf.mxu0
        %v1830 = vadd.f32 %v1666, %v1829
        %1831 = vmatmul.f32.gmra.mxu0 %v1603
        %v1832 = vpop.f32.mrf.mxu0
        %v1833 = vadd.f32 %v1666, %v1832
        %1834 = vmatmul.f32.gmra.mxu0 %v1604
        %v1835 = vpop.f32.mrf.mxu0
        %v1836 = vadd.f32 %v1666, %v1835
        %1837 = vmatmul.f32.gmra.mxu0 %v1605
        %v1838 = vpop.f32.mrf.mxu0
        %v1839 = vadd.f32 %v1666, %v1838
        %1840 = vmatmul.f32.gmra.mxu0 %v1606
        %v1841 = vpop.f32.mrf.mxu0
        %v1842 = vadd.f32 %v1666, %v1841
        %1843 = vmatmul.f32.gmra.mxu0 %v1607
        %v1844 = vpop.f32.mrf.mxu0
        %v1845 = vadd.f32 %v1666, %v1844
        %1846 = vmatmul.f32.gmra.mxu0 %v1608
        %v1847 = vpop.f32.mrf.mxu0
        %v1848 = vadd.f32 %v1666, %v1847
        %1849 = vmatmul.f32.gmra.mxu0 %v1609
        %v1850 = vpop.f32.mrf.mxu0
        %v1851 = vadd.f32 %v1666, %v1850
        %1852 = vmatmul.f32.gmra.mxu0 %v1610
        %v1853 = vpop.f32.mrf.mxu0
        %v1854 = vadd.f32 %v1666, %v1853
        %1855 = vmatmul.f32.gmra.mxu0 %v1611
        %v1856 = vpop.f32.mrf.mxu0
        %v1857 = vadd.f32 %v1666, %v1856
        %1858 = vmatmul.f32.gmra.mxu0 %v1612
        %v1859 = vpop.f32.mrf.mxu0
        %v1860 = vadd.f32 %v1666, %v1859
        %1861 = vmatmul.f32.gmra.mxu0 %v1613
        %v1862 = vpop.f32.mrf.mxu0
        %v1863 = vadd.f32 %v1666, %v1862
        %1864 = vdwg.mxu0
        %v1865 = vadd.f32 %v1688, %v1753
        %v1866 = vadd.f32 %v1691, %v1756
        %v1867 = vadd.f32 %v1694, %v1759
        %v1868 = vadd.f32 %v1697, %v1762
        %v1869 = vadd.f32 %v1700, %v1765
        %v1870 = vadd.f32 %v1703, %v1768
        %v1871 = vadd.f32 %v1706, %v1771
        %v1872 = vadd.f32 %v1709, %v1774
        %v1873 = vadd.f32 %v1712, %v1777
        %v1874 = vadd.f32 %v1715, %v1780
        %v1875 = vadd.f32 %v1718, %v1783
        %v1876 = vadd.f32 %v1721, %v1786
        %v1877 = vadd.f32 %v1724, %v1789
        %v1878 = vadd.f32 %v1727, %v1792
        %v1879 = vadd.f32 %v1730, %v1795
        %v1880 = vadd.f32 %v1733, %v1798
        %v1881 = vadd.f32 %v1865, %v1112
        %v1882 = vadd.f32 %v1866, %v1113
        %v1883 = vadd.f32 %v1867, %v1114
        %v1884 = vadd.f32 %v1868, %v1115
        %v1885 = vadd.f32 %v1869, %v1116
        %v1886 = vadd.f32 %v1870, %v1117
        %v1887 = vadd.f32 %v1871, %v1118
        %v1888 = vadd.f32 %v1872, %v1119
        %v1889 = vadd.f32 %v1873, %v1120
        %v1890 = vadd.f32 %v1874, %v1121
        %v1891 = vadd.f32 %v1875, %v1122
        %v1892 = vadd.f32 %v1876, %v1123
        %v1893 = vadd.f32 %v1877, %v1124
        %v1894 = vadd.f32 %v1878, %v1125
        %v1895 = vadd.f32 %v1879, %v1126
        %v1896 = vadd.f32 %v1880, %v1127
        %v1897 = vmul.f32 %v1881, 0.70710677
        %v1898 = vmul.f32 %v1882, 0.70710677
        %v1899 = vmul.f32 %v1883, 0.70710677
        %v1900 = vmul.f32 %v1884, 0.70710677
        %v1901 = vmul.f32 %v1885, 0.70710677
        %v1902 = vmul.f32 %v1886, 0.70710677
        %v1903 = vmul.f32 %v1887, 0.70710677
        %v1904 = vmul.f32 %v1888, 0.70710677
        %v1905 = vmul.f32 %v1889, 0.70710677
        %v1906 = vmul.f32 %v1890, 0.70710677
        %v1907 = vmul.f32 %v1891, 0.70710677
        %v1908 = vmul.f32 %v1892, 0.70710677
        %v1909 = vmul.f32 %v1893, 0.70710677
        %v1910 = vmul.f32 %v1894, 0.70710677
        %v1911 = vmul.f32 %v1895, 0.70710677
        %v1912 = vmul.f32 %v1896, 0.70710677
        %1913 = vst [vmem:[%s436] sm:$0xff] %v1897
        %1914 = vst [vmem:[%s436 + $0x8] sm:$0xff] %v1898
        %1915 = vst [vmem:[%s436 + $0x10] sm:$0xff] %v1899
        %1916 = vst [vmem:[%s436 + $0x18] sm:$0xff] %v1900
        %1917 = vst [vmem:[%s436 + $0x20] sm:$0xff] %v1901
        %1918 = vst [vmem:[%s436 + $0x28] sm:$0xff] %v1902
        %1919 = vst [vmem:[%s436 + $0x30] sm:$0xff] %v1903
        %1920 = vst [vmem:[%s436 + $0x38] sm:$0xff] %v1904
        %1921 = vst [vmem:[%s436 + $0x40] sm:$0xff] %v1905
        %1922 = vst [vmem:[%s436 + $0x48] sm:$0xff] %v1906
        %1923 = vst [vmem:[%s436 + $0x50] sm:$0xff] %v1907
        %1924 = vst [vmem:[%s436 + $0x58] sm:$0xff] %v1908
        %1925 = vst [vmem:[%s436 + $0x60] sm:$0xff] %v1909
        %1926 = vst [vmem:[%s436 + $0x68] sm:$0xff] %v1910
        %1927 = vst [vmem:[%s436 + $0x70] sm:$0xff] %v1911
        %1928 = vst [vmem:[%s436 + $0x78] sm:$0xff] %v1912
        %v1929 = vmul.f32 %v1818, %v645
        %v1930 = vmul.f32 %v1821, %v648
        %v1931 = vmul.f32 %v1824, %v651
        %v1932 = vmul.f32 %v1827, %v654
        %v1933 = vmul.f32 %v1830, %v657
        %v1934 = vmul.f32 %v1833, %v660
        %v1935 = vmul.f32 %v1836, %v663
        %v1936 = vmul.f32 %v1839, %v666
        %v1937 = vmul.f32 %v1842, %v669
        %v1938 = vmul.f32 %v1845, %v672
        %v1939 = vmul.f32 %v1848, %v675
        %v1940 = vmul.f32 %v1851, %v678
        %v1941 = vmul.f32 %v1854, %v681
        %v1942 = vmul.f32 %v1857, %v684
        %v1943 = vmul.f32 %v1860, %v687
        %v1944 = vmul.f32 %v1863, %v690
        %1945 = vst [vmem:[%s443] sm:$0xff] %v1929
        %1946 = vst [vmem:[%s443 + $0x18] sm:$0xff] %v1930
        %1947 = vst [vmem:[%s443 + $0x30] sm:$0xff] %v1931
        %1948 = vst [vmem:[%s443 + $0x48] sm:$0xff] %v1932
        %1949 = vst [vmem:[%s443 + $0x60] sm:$0xff] %v1933
        %1950 = vst [vmem:[%s443 + $0x78] sm:$0xff] %v1934
        %1951 = vst [vmem:[%s443 + $0x90] sm:$0xff] %v1935
        %1952 = vst [vmem:[%s443 + $0xa8] sm:$0xff] %v1936
        %1953 = vst [vmem:[%s443 + $0xc0] sm:$0xff] %v1937
        %1954 = vst [vmem:[%s443 + $0xd8] sm:$0xff] %v1938
        %1955 = vst [vmem:[%s443 + $0xf0] sm:$0xff] %v1939
        %1956 = vst [vmem:[%s443 + $0x108] sm:$0xff] %v1940
        %1957 = vst [vmem:[%s443 + $0x120] sm:$0xff] %v1941
        %1958 = vst [vmem:[%s443 + $0x138] sm:$0xff] %v1942
        %1959 = vst [vmem:[%s443 + $0x150] sm:$0xff] %v1943
        %1960 = vst [vmem:[%s443 + $0x168] sm:$0xff] %v1944
        %v1961 = vmul.f32 %v1818, %v775
        %v1962 = vmul.f32 %v1821, %v778
        %v1963 = vmul.f32 %v1824, %v781
        %v1964 = vmul.f32 %v1827, %v784
        %v1965 = vmul.f32 %v1830, %v787
        %v1966 = vmul.f32 %v1833, %v790
        %v1967 = vmul.f32 %v1836, %v793
        %v1968 = vmul.f32 %v1839, %v796
        %v1969 = vmul.f32 %v1842, %v799
        %v1970 = vmul.f32 %v1845, %v802
        %v1971 = vmul.f32 %v1848, %v805
        %v1972 = vmul.f32 %v1851, %v808
        %v1973 = vmul.f32 %v1854, %v811
        %v1974 = vmul.f32 %v1857, %v814
        %v1975 = vmul.f32 %v1860, %v817
        %v1976 = vmul.f32 %v1863, %v820
        %1977 = vst [vmem:[%s443 + $0x8] sm:$0xff] %v1961
        %1978 = vst [vmem:[%s443 + $0x20] sm:$0xff] %v1962
        %1979 = vst [vmem:[%s443 + $0x38] sm:$0xff] %v1963
        %1980 = vst [vmem:[%s443 + $0x50] sm:$0xff] %v1964
        %1981 = vst [vmem:[%s443 + $0x68] sm:$0xff] %v1965
        %1982 = vst [vmem:[%s443 + $0x80] sm:$0xff] %v1966
        %1983 = vst [vmem:[%s443 + $0x98] sm:$0xff] %v1967
        %1984 = vst [vmem:[%s443 + $0xb0] sm:$0xff] %v1968
        %1985 = vst [vmem:[%s443 + $0xc8] sm:$0xff] %v1969
        %1986 = vst [vmem:[%s443 + $0xe0] sm:$0xff] %v1970
        %1987 = vst [vmem:[%s443 + $0xf8] sm:$0xff] %v1971
        %1988 = vst [vmem:[%s443 + $0x110] sm:$0xff] %v1972
        %1989 = vst [vmem:[%s443 + $0x128] sm:$0xff] %v1973
        %1990 = vst [vmem:[%s443 + $0x140] sm:$0xff] %v1974
        %1991 = vst [vmem:[%s443 + $0x158] sm:$0xff] %v1975
        %1992 = vst [vmem:[%s443 + $0x170] sm:$0xff] %v1976
        %v1993 = vmul.f32 %v1818, %v905
        %v1994 = vmul.f32 %v1821, %v908
        %v1995 = vmul.f32 %v1824, %v911
        %v1996 = vmul.f32 %v1827, %v914
        %v1997 = vmul.f32 %v1830, %v917
        %v1998 = vmul.f32 %v1833, %v920
        %v1999 = vmul.f32 %v1836, %v923
        %v2000 = vmul.f32 %v1839, %v926
        %v2001 = vmul.f32 %v1842, %v929
        %v2002 = vmul.f32 %v1845, %v932
        %v2003 = vmul.f32 %v1848, %v935
        %v2004 = vmul.f32 %v1851, %v938
        %v2005 = vmul.f32 %v1854, %v941
        %v2006 = vmul.f32 %v1857, %v944
        %v2007 = vmul.f32 %v1860, %v947
        %v2008 = vmul.f32 %v1863, %v950
        %2009 = vst [vmem:[%s443 + $0x10] sm:$0xff] %v1993
        %2010 = vst [vmem:[%s443 + $0x28] sm:$0xff] %v1994
        %2011 = vst [vmem:[%s443 + $0x40] sm:$0xff] %v1995
        %2012 = vst [vmem:[%s443 + $0x58] sm:$0xff] %v1996
        %2013 = vst [vmem:[%s443 + $0x70] sm:$0xff] %v1997
        %2014 = vst [vmem:[%s443 + $0x88] sm:$0xff] %v1998
        %2015 = vst [vmem:[%s443 + $0xa0] sm:$0xff] %v1999
        %2016 = vst [vmem:[%s443 + $0xb8] sm:$0xff] %v2000
        %2017 = vst [vmem:[%s443 + $0xd0] sm:$0xff] %v2001
        %2018 = vst [vmem:[%s443 + $0xe8] sm:$0xff] %v2002
        %2019 = vst [vmem:[%s443 + $0x100] sm:$0xff] %v2003
        %2020 = vst [vmem:[%s443 + $0x118] sm:$0xff] %v2004
        %2021 = vst [vmem:[%s443 + $0x130] sm:$0xff] %v2005
        %2022 = vst [vmem:[%s443 + $0x148] sm:$0xff] %v2006
        %2023 = vst [vmem:[%s443 + $0x160] sm:$0xff] %v2007
        %2024 = vst [vmem:[%s443 + $0x178] sm:$0xff] %v2008
        %s2025 = sand.u32 %s198, 1
        %s2026 = scalar_lea.sflag [#allocation4], %s2025
        %s2027 = sand.u32 %s198, 1
        %s2028 = smul.addr %s2027, 128
        %s2029 = scalar_lea.vmem [#allocation11], %s2028
        %s2030 = sand.u32 %s224, 1
        %s2031 = scalar_lea.sflag [#allocation13], %s2030
        %s2032 = sand.u32 %s224, 1
        %s2033 = smul.addr %s2032, 384
        %s2034 = scalar_lea.vmem [#allocation12], %s2033
        // Predicated region
        $region69: #{tpu_custom_call.1} parent=47 // pred_check
          %p2035 = pneg %p208
        $region70: #{tpu_custom_call.1} parent=47 // pred_check_branch
          %2037 = sbr.rel (%p2035) target = $region72
        $region71: #{tpu_custom_call.1} parent=47 // pred_region
          %s2038 = smul.u32 16, %s33
          %s2039 = ssub.s32 38, %s2038
          %p2040 = scmp.lt.s32.totalorder %s2039, 16
          %s2041 = scalar_select %p2040, %s2039, 16
          %s2042 = smul.u32 8, %s2041
          %s2043 = ssub.s32 128, %s2042
          %s2044 = sshll.u32 %s2043, 4
          %2045 = vsyncadd %s2026, %s2044
          %p2046 = scmp.ne.s32.totalorder 0, %s2042
          %s2047 = smul.addr %s2038, 8
          %s2048 = scalar_lea.hbm %s7, %s2047
          %s2049 = smul.u32 8, %s2041
          %s2050 = sshll.u32 %s2029, 4
          %s2051 = int_to_ptr.vmem [resolvable:$true] %s2050
          %s2052 = sshll.u32 %s2048, 4
          %s2053 = int_to_ptr.hbm [resolvable:$true] %s2052
          %s2054 = sshll.u32 %s2049, 4
          %2058 = dma.vmem_to_hbm [thread:$0]  (%p2046), %s2051, %s2054, %s2053, %s2026, 128, 128, 8
        $region72: #{tpu_custom_call.1} parent=47 // pred_fallthru
          _
        // Predicated region
        $region73: #{tpu_custom_call.1} parent=47 // pred_check
          %p2059 = pneg %p234
        $region74: #{tpu_custom_call.1} parent=47 // pred_check_branch
          %2061 = sbr.rel (%p2059) target = $region76
        $region75: #{tpu_custom_call.1} parent=47 // pred_region
          %s2062 = smul.u32 16, %s33
          %s2063 = ssub.s32 38, %s2062
          %p2064 = scmp.lt.s32.totalorder %s2063, 16
          %s2065 = scalar_select %p2064, %s2063, 16
          %s2066 = smul.u32 8, %s2065
          %s2067 = smul.u32 %s2066, 3
          %s2068 = ssub.s32 384, %s2067
          %s2069 = sshll.u32 %s2068, 4
          %2070 = vsyncadd %s2031, %s2069
          %p2071 = scmp.ne.s32.totalorder 0, %s2067
          %s2072 = smul.addr %s2062, 3
          %s2073 = smul.addr %s2072, 8
          %s2074 = scalar_lea.hbm %s8, %s2073
          %s2075 = smul.u32 24, %s2065
          %s2076 = sshll.u32 %s2034, 4
          %s2077 = int_to_ptr.vmem [resolvable:$true] %s2076
          %s2078 = sshll.u32 %s2074, 4
          %s2079 = int_to_ptr.hbm [resolvable:$true] %s2078
          %s2080 = sshll.u32 %s2075, 4
          %2084 = dma.vmem_to_hbm [thread:$0]  (%p2071), %s2077, %s2080, %s2079, %s2031, 384, 384, 24
        $region76: #{tpu_custom_call.1} parent=47 // pred_fallthru
          _
      $region48: #{tpu_custom_call.1} parent=5 // pred_fallthru
        _
      %p2085 = scmp.le.s32.totalorder 2, %s28
      // Predicated region
      $region77: #{tpu_custom_call.1} parent=5 // pred_check
        %p2086 = pneg %p2085
      $region78: #{tpu_custom_call.1} parent=5 // pred_check_branch
        %2088 = sbr.rel (%p2086) target = $region80
      $region79: #{tpu_custom_call.1} parent=5 // pred_region
        %s2089 = ssub.s32 %s28, 2
        // Predicated region
        $region81: #{tpu_custom_call.1} parent=79 // pred_check
          %p2090 = pneg %p214
        $region82: #{tpu_custom_call.1} parent=79 // pred_check_branch
          %2092 = sbr.rel (%p2090) target = $region84
        $region83: #{tpu_custom_call.1} parent=79 // pred_region
          %s2093 = sand.u32 %s199, 1
          %s2094 = scalar_lea.sflag [#allocation4], %s2093
          %s2095 = sand.u32 %s199, 1
          %s2096 = smul.addr %s2095, 128
          %s2097 = scalar_lea.vmem [#allocation11], %s2096
          %2099 = dma.done %s2094, 2048
        $region84: #{tpu_custom_call.1} parent=79 // pred_fallthru
          _
        // Predicated region
        $region85: #{tpu_custom_call.1} parent=79 // pred_check
          %p2100 = pneg %p240
        $region86: #{tpu_custom_call.1} parent=79 // pred_check_branch
          %2102 = sbr.rel (%p2100) target = $region88
        $region87: #{tpu_custom_call.1} parent=79 // pred_region
          %s2103 = sand.u32 %s225, 1
          %s2104 = scalar_lea.sflag [#allocation13], %s2103
          %s2105 = sand.u32 %s225, 1
          %s2106 = smul.addr %s2105, 384
          %s2107 = scalar_lea.vmem [#allocation12], %s2106
          %2109 = dma.done %s2104, 6144
        $region88: #{tpu_custom_call.1} parent=79 // pred_fallthru
          _
      $region80: #{tpu_custom_call.1} parent=5 // pred_fallthru
        _
    $region6: #{tpu_custom_call.1} parent=1 // loop_footer
      %s32 = sadd.s32 1, %s28
    $region7: #{tpu_custom_call.1} parent=1 // loop_footer_branch
      %27 = sbr.rel target = $region3
    $region8: #{tpu_custom_call.1} parent=1 // loop_exit
      _
    %2110 = vsyncpa [#allocation3], 1
    %s2111 = scalar_lea.sflag [#allocation3], 1
    %2112 = vsyncpa %s2111, 1
    %2113 = vsyncpa [#allocation6], 1
    %s2114 = scalar_lea.sflag [#allocation6], 1
    %2115 = vsyncpa %s2114, 1
    %2116 = vsyncpa [#allocation9], 1
    %2117 = vsyncpa [#allocation4], 1
    %s2118 = scalar_lea.sflag [#allocation4], 1
    %2119 = vsyncpa %s2118, 1
    %2120 = vsyncpa [#allocation13], 1
    %s2121 = scalar_lea.sflag [#allocation13], 1
    %2122 = vsyncpa %s2121, 1

</llo_original>
